<compile_context>
chip_gen: v6e
topology: v6e:2x2x1
jax: 0.10.0
libtpu: 0.0.40
codegen_flags: <defaults>
</compile_context>

<pallas_src>
import functools

import jax
import jax.numpy as jnp
from jax.experimental import pallas as pl
from jax.experimental.pallas import tpu as pltpu


def _round_up(x: int, m: int) -> int:
    return (x + m - 1) // m * m


def _select_tiles(D: int, tk: int, tn: int):
    """Pick lane-aligned tile sizes and padded extents for a (D, D) matrix."""
    lane_d = _round_up(D, 128)
    tk = max(128, min(tk, lane_d))
    tn = max(128, min(tn, lane_d))
    # Guarantee >= 2 N-blocks once the problem is big enough so the "parallel"
    # N axis actually feeds both TensorCores on v7x (no-op on v5e/v6e).
    if lane_d >= 256:
        tn = min(tn, _round_up((lane_d + 1) // 2, 128))
    dk = _round_up(D, tk)   # padded reduction extent (zero pad contributes 0)
    dn = _round_up(D, tn)   # padded output extent (extra cols sliced off)
    return tk, tn, dk, dn


def _zca_kernel_accum_out(tk, x_ref, mat_ref, o_ref):
    """One (n, k) grid step, f32 output: accumulate directly into o_ref.

    x_ref:   (B, dk)   pre-centered input, resident across the whole grid
    mat_ref: (tk, tn)  whitening-matrix tile (streamed)
    o_ref:   (B, tn)   f32 output tile, resident across the K grid axis
    """
    k = pl.program_id(1)

    @pl.when(k == 0)
    def _():
        o_ref[...] = jnp.zeros_like(o_ref)

    start = pl.multiple_of(k * tk, tk)
    o_ref[...] += jnp.dot(
        x_ref[:, pl.ds(start, tk)], mat_ref[...],
        preferred_element_type=jnp.float32,
    )


def _zca_kernel_scratch(tk, x_ref, mat_ref, o_ref, acc_ref):
    """Same as above but with an f32 scratch accumulator (non-f32 outputs)."""
    k = pl.program_id(1)

    @pl.when(k == 0)
    def _():
        acc_ref[...] = jnp.zeros_like(acc_ref)

    start = pl.multiple_of(k * tk, tk)
    acc_ref[...] += jnp.dot(
        x_ref[:, pl.ds(start, tk)], mat_ref[...],
        preferred_element_type=jnp.float32,
    )

    @pl.when(k == pl.num_programs(1) - 1)
    def _():
        o_ref[...] = acc_ref[...].astype(o_ref.dtype)


def _vmem_limit(need_bytes: int) -> int:
    """Request enough VMEM for the tiles, capped below physical capacity."""
    cap = 56 * 1024 * 1024
    try:
        cap = min(cap, int(pltpu.get_tpu_info().vmem_capacity_bytes) - (8 << 20))
    except Exception:
        pass  # fall back to the conservative 56 MiB cap (safe on v7x's 64 MiB)
    return max(16 * 1024 * 1024, min(int(need_bytes * 1.5) + (4 << 20), cap))


@functools.partial(jax.jit, static_argnames=("D", "dk", "dn", "tk", "tn"))
def _zca_forward_impl(x, mat, mean, *, D, dk, dn, tk, tn):
    if x.ndim != 4:
        raise RuntimeError(
            f"Dimension of `input` is expected to be 4 but got {x.ndim}"
        )
    B = x.shape[0]
    if x.shape[1] * x.shape[2] * x.shape[3] != D:
        raise ValueError("input feature size does not match the ZCA matrix")

    compute_dtype = mat.dtype
    out_dtype = x.dtype

    # Hoisted centering + cast: one O(B*D) pass, negligible vs matrix traffic.
    x_c = (x.reshape(B, D) - mean).astype(compute_dtype)
    if dk != D:
        x_c = jnp.pad(x_c, ((0, 0), (0, dk - D)))

    n_blocks = dn // tn
    k_blocks = dk // tk

    mat_bytes = jnp.dtype(compute_dtype).itemsize
    out_bytes = jnp.dtype(out_dtype).itemsize

    if out_dtype == jnp.float32:
        kernel = functools.partial(_zca_kernel_accum_out, tk)
        scratch = []
    else:
        kernel = functools.partial(_zca_kernel_scratch, tk)
        scratch = [pltpu.VMEM((B, tn), jnp.float32)]

    # VMEM footprint: double-buffered matrix tile dominates; x / out / acc are
    # tiny (B is a handful of rows).
    need = (2 * tk * tn * mat_bytes          # matrix tile, double-buffered
            + B * dk * mat_bytes             # resident x
            + 2 * B * tn * max(out_bytes, 4)  # output tile, double-buffered
            + B * tn * 4)                     # optional scratch accumulator

    cost = pl.CostEstimate(
        flops=2 * B * dk * dn,
        transcendentals=0,
        bytes_accessed=dk * dn * mat_bytes + B * dk * mat_bytes + B * dn * out_bytes,
    )

    out_flat = pl.pallas_call(
        kernel,
        out_shape=jax.ShapeDtypeStruct((B, dn), out_dtype),
        grid_spec=pltpu.PrefetchScalarGridSpec(
            num_scalar_prefetch=0,
            grid=(n_blocks, k_blocks),                        # K innermost
            in_specs=[
                # x: constant block index -> DMA'd once, resident in VMEM.
                pl.BlockSpec((B, dk), lambda n, k: (0, 0)),
                # matrix tile stream (the only real HBM traffic).
                pl.BlockSpec((tk, tn), lambda n, k: (k, n)),
            ],
            out_specs=pl.BlockSpec((B, tn), lambda n, k: (0, n)),  # resident over K
            scratch_shapes=scratch,
        ),
        compiler_params=pltpu.CompilerParams(
            dimension_semantics=("parallel", "arbitrary"),  # N parallel (v7x 2 TCs)
            vmem_limit_bytes=_vmem_limit(need),
        ),
        cost_estimate=cost,
    )(x_c, mat)

    if dn != D:
        out_flat = out_flat[:, :D]
    return out_flat.reshape(x.shape)


def make_zca(matrix, mean, *, matrix_dtype=jnp.bfloat16, tk=2048, tn=2048):
    """Build the ZCA forward callable.

    Equivalent to constructing `ZCA(matrix, mean)`: the (D, D) whitening
    matrix is cast/padded ONCE here, outside the per-call hot path.
    """
    matrix = jnp.asarray(matrix)
    mean = jnp.asarray(mean).reshape(1, -1)
    D = matrix.shape[0]
    assert matrix.shape == (D, D), matrix.shape
    assert mean.shape == (1, D), mean.shape

    tk_, tn_, dk, dn = _select_tiles(D, tk, tn)

    mat = matrix.astype(matrix_dtype)
    if (dk, dn) != (D, D):
        mat = jnp.pad(mat, ((0, dk - D), (0, dn - D)))
    mat = jax.block_until_ready(mat)   # materialize preprocessed matrix once

    def forward(x):
        return _zca_forward_impl(x, mat, mean, D=D, dk=dk, dn=dn, tk=tk_, tn=tn_)

    return forward


if __name__ == "__main__":
    # Small shapes consistent with the module: batch=2, channels=4, spatial=16.
    B, C, H, W = 2, 4, 16, 16
    D = C * H * W

    key = jax.random.PRNGKey(0)
    kx, km, kmean = jax.random.split(key, 3)

    x = jax.random.normal(kx, (B, C, H, W), dtype=jnp.float32)
    matrix = jax.random.normal(km, (D, D), dtype=jnp.float32) / jnp.sqrt(D)
    mean = jax.random.normal(kmean, (1, D), dtype=jnp.float32)

    x_flat = x.reshape(B, D) - mean
    ref_plain = (x_flat @ matrix).reshape(x.shape)
    ref_bf16 = jnp.dot(
        x_flat.astype(jnp.bfloat16), matrix.astype(jnp.bfloat16),
        preferred_element_type=jnp.float32,
    ).reshape(x.shape)

    # Default path: bf16 matrix streaming, f32 accumulation.
    zca = make_zca(matrix, mean)
    out = jax.block_until_ready(zca(x))
    assert out.shape == x.shape and out.dtype == x.dtype
    assert jnp.allclose(out, ref_bf16, atol=1e-2, rtol=1e-2)   # vs bf16-consistent ref
    assert jnp.allclose(out, ref_plain, atol=5e-2, rtol=5e-2)  # vs f32 ref (bf16 level)

    # Exact f32 matrix path.
    zca_f32 = make_zca(matrix, mean, matrix_dtype=jnp.float32)
    out_f32 = jax.block_until_ready(zca_f32(x))
    assert jnp.allclose(out_f32, ref_plain, atol=1e-3, rtol=1e-3)

    # Remainder-handling path: D not a multiple of 128 / the tile sizes.
    C2, H2, W2 = 3, 10, 10
    D2 = C2 * H2 * W2
    x2 = jax.random.normal(kx, (B, C2, H2, W2), dtype=jnp.float32)
    m2 = jax.random.normal(km, (D2, D2), dtype=jnp.float32) / jnp.sqrt(D2)
    mn2 = jax.random.normal(kmean, (1, D2), dtype=jnp.float32)
    zca2 = make_zca(m2, mn2, matrix_dtype=jnp.float32)
    out2 = jax.block_until_ready(zca2(x2))
    ref2 = ((x2.reshape(B, -1) - mn2) @ m2).reshape(x2.shape)
    assert jnp.allclose(out2, ref2, atol=1e-3, rtol=1e-3)

    print("KERNEL_OK")
</pallas_src>

<mosaic_0001>
module attributes {stable_mosaic.version = 11 : i64} {
  func.func @_zca_kernel_accum_out(%arg0: i32, %arg1: i32, %arg2: memref<2x1024xbf16, #tpu.memory_space<vmem>>, %arg3: memref<1024x512xbf16, #tpu.memory_space<vmem>>, %arg4: memref<2x512xf32, #tpu.memory_space<vmem>>) attributes {dimension_semantics = [#tpu.dimension_semantics<parallel>, #tpu.dimension_semantics<arbitrary>], iteration_bounds = array<i64: 2, 1>, scalar_prefetch = 0 : i64, scratch_operands = 0 : i64, tpu.core_type = #tpu.core_type<tc>, window_params = [{pipeline_mode = #tpu.pipeline_mode<synchronous>, transform_indices = @transform_0, window_bounds = array<i64: 2, 1024>}, {transform_indices = @transform_1, window_bounds = array<i64: 1024, 512>}, {transform_indices = @transform_2, window_bounds = array<i64: 2, 512>}]} {
    %c0_i32 = arith.constant 0 : i32
    %0 = arith.cmpi eq, %arg1, %c0_i32 : i32
    %1 = arith.extui %0 : i1 to i32
    %c0_i32_0 = arith.constant 0 : i32
    %2 = arith.cmpi ne, %1, %c0_i32_0 : i32
    scf.if %2 {
      %cst_7 = arith.constant 0.000000e+00 : f32
      %12 = vector.broadcast %cst_7 : f32 to vector<2x512xf32>
      %c0_8 = arith.constant 0 : index
      %c0_9 = arith.constant 0 : index
      %13 = vector.load %arg4[%c0_8, %c0_9] : memref<2x512xf32, #tpu.memory_space<vmem>>, vector<2x512xf32>
      tpu.vector_store %arg4[%c0_8, %c0_9], %12 {strides = array<i32>} : memref<2x512xf32, #tpu.memory_space<vmem>>, vector<2x512xf32>,
    } else {
    }
    %c1024_i32 = arith.constant 1024 : i32
    %3 = arith.muli %arg1, %c1024_i32 : i32
    %4 = tpu.assume_multiple %3, 1024 : i32
    %c0 = arith.constant 0 : index
    %c0_1 = arith.constant 0 : index
    %5 = vector.load %arg4[%c0, %c0_1] : memref<2x512xf32, #tpu.memory_space<vmem>>, vector<2x512xf32>
    %c0_2 = arith.constant 0 : index
    %6 = arith.index_cast %4 : i32 to index
    %7 = vector.load %arg2[%c0_2, %6] : memref<2x1024xbf16, #tpu.memory_space<vmem>>, vector<2x1024xbf16>
    %c0_3 = arith.constant 0 : index
    %c0_4 = arith.constant 0 : index
    %8 = vector.load %arg3[%c0_3, %c0_4] : memref<1024x512xbf16, #tpu.memory_space<vmem>>, vector<1024x512xbf16>
    %cst = arith.constant dense<0.000000e+00> : vector<2x512xf32>
    %9 = tpu.matmul %7, %8, %cst {dimension_numbers = #tpu.dot_dimension_numbers<[1], [0], [0], [1], [0, 0, 1, 1], [], []>} : vector<2x1024xbf16>, vector<1024x512xbf16>, vector<2x512xf32> -> vector<2x512xf32>
    %10 = arith.addf %5, %9 : vector<2x512xf32>
    %c0_5 = arith.constant 0 : index
    %c0_6 = arith.constant 0 : index
    %11 = vector.load %arg4[%c0_5, %c0_6] : memref<2x512xf32, #tpu.memory_space<vmem>>, vector<2x512xf32>
    tpu.vector_store %arg4[%c0_5, %c0_6], %10 {strides = array<i32>} : memref<2x512xf32, #tpu.memory_space<vmem>>, vector<2x512xf32>,
    return
  }
  func.func @transform_0(%arg0: i32, %arg1: i32) -> (i32, i32) {
    %c0_i32 = arith.constant 0 : i32
    %c0_i32_0 = arith.constant 0 : i32
    %c0_i32_1 = arith.constant 0 : i32
    return %c0_i32, %c0_i32_0 : i32, i32
  }
  func.func @transform_1(%arg0: i32, %arg1: i32) -> (i32, i32) {
    %c0_i32 = arith.constant 0 : i32
    return %arg1, %arg0 : i32, i32
  }
  func.func @transform_2(%arg0: i32, %arg1: i32) -> (i32, i32) {
    %c0_i32 = arith.constant 0 : i32
    %c0_i32_0 = arith.constant 0 : i32
    return %c0_i32, %arg0 : i32, i32
  }
}

</mosaic_0001>

<llo_original>
// kernel: _zca_forward_impl.1
$region0: #{_zca_forward_impl.1}
  #allocation0 [shape = 'u32[]', space=smem, size = 0x4, offset = 0x4, fixed_abs, tag = 'smem constant byte address 0x4 - core index']
  #allocation1 [shape = 'u32[144,128]{1,0:T(1,128)}', space=vmem, size = 0x12000, scoped, tag = 'internal scratch']
  %s0 = inlined_call_operand.vmem [shape: bf16[2,1024], index: 0, kind: input, shape index: {}]
  %s1 = inlined_call_operand.hbm [shape: bf16[1024,1024], index: 1, kind: input, shape index: {}]
  %s2 = inlined_call_operand.vmem [shape: f32[2,1024], index: 2, kind: output, shape index: {}]
  %s3 = sld [smem:[#allocation0]]
  $region49: #{_zca_forward_impl.1} parent=0
    _
  %s5 = ssub.s32 1, %s3
  %s6 = scalar_select 0, %s5, %s3
  $region1: #{_zca_forward_impl.1} parent=0
    #allocation2 [shape = 'u8[2097152]{0}', space=vmem, size = 0x200000, scoped, tag = 'input window, operand 1']
    #allocation3 [shape = 's32[2]{0}', space=sflag, size = 0x8, scoped, tag = 'scoped memory for _zca_forward_impl.1']
    %7 = vsyncpa [#allocation3], 0
    %s8 = scalar_lea.sflag [#allocation3], 1
    %9 = vsyncpa %s8, 0
    loop: start=0, step=1, limit=4
    $region2: #{_zca_forward_impl.1} parent=1 // loop_pre_header
      _
    $region3: #{_zca_forward_impl.1} parent=1 // loop_header
      %s11 = sphi 0, %s15
      %p12 = scmp.ge.s32.totalorder %s11, 4
      %s18 = sphi 0, %s30
      %s19 = sphi 0, %s26
      %s20 = sphi 0, %s18
      %s21 = sphi 0, %s19
      %s22 = sphi 0, %s20
      %s23 = sphi 0, %s21
      %s31 = sphi 0, %s31
      %s33 = sphi 0, %s31
      %s34 = sphi 0, %s33
      %s48 = sphi 0, %s34
      %s56 = sphi 0, %s58
      %s59 = sphi 0, %s56
      %s60 = sphi 0, %s59
      %s76 = sphi 0, %s60
      %s82 = sphi 0, %s84
      %s85 = sphi 0, %s82
      %s86 = sphi 0, %s85
      %s102 = sphi 0, %s86
    $region4: #{_zca_forward_impl.1} parent=1 // loop_header_branch
      %14 = sbr.rel (%p12) target = $region8
    $region5: #{_zca_forward_impl.1} parent=1 // loop_body
      %s16 = ssub.s32 %s11, 1
      %s17 = ssub.s32 %s11, 2
      %s24 = sadd.s32 1, %s19
      %p25 = scmp.ge.s32.totalorder %s24, 1
      %s26 = scalar_select %p25, 0, %s24
      %s27 = sadd.s32 1, %s18
      %s28 = scalar_select %p25, %s27, %s18
      %p29 = scmp.ge.s32.totalorder %s28, 2
      %s30 = scalar_select %p29, 0, %s28
      %s32 = sadd.s32 %s31, 1
      %p35 = scmp.eq.s32.totalorder %s11, 1
      %p36 = scmp.ne.s32.totalorder %s31, %s33
      %p37 = scmp.eq.s32.totalorder %s11, 0
      %p38 = por %p36, %p37
      %p39 = scmp.ne.s32.totalorder %s31, %s33
      %p40 = scmp.eq.s32.totalorder %s16, 1
      %p41 = por %p39, %p40
      %p42 = scmp.ne.s32.totalorder %s33, %s34
      %p43 = scmp.eq.s32.totalorder %s16, 0
      %p44 = por %p42, %p43
      %p45 = scmp.ne.s32.totalorder %s33, %s34
      %p46 = scmp.eq.s32.totalorder %s17, 1
      %p47 = por %p45, %p46
      %p49 = scmp.ne.s32.totalorder %s34, %s48
      %p50 = scmp.eq.s32.totalorder %s17, 0
      %p51 = por %p49, %p50
      %s52 = ssub.s32 %s19, %s26
      %s53 = ssub.s32 %s18, %s30
      %s54 = sor.u32 %s52, %s53
      %p55 = scmp.eq.s32.totalorder %s54, 0
      %s57 = sadd.s32 %s56, 1
      %s58 = scalar_select %p55, %s56, %s57
      %p61 = pneg %p55
      %p62 = scmp.eq.s32.totalorder %s11, 1
      %p63 = por %p61, %p62
      %p64 = scmp.ne.s32.totalorder %s56, %s59
      %p65 = scmp.eq.s32.totalorder %s11, 0
      %p66 = por %p64, %p65
      %p67 = scmp.ne.s32.totalorder %s56, %s59
      %p68 = scmp.eq.s32.totalorder %s16, 1
      %p69 = por %p67, %p68
      %p70 = scmp.ne.s32.totalorder %s59, %s60
      %p71 = scmp.eq.s32.totalorder %s16, 0
      %p72 = por %p70, %p71
      %p73 = scmp.ne.s32.totalorder %s59, %s60
      %p74 = scmp.eq.s32.totalorder %s17, 1
      %p75 = por %p73, %p74
      %p77 = scmp.ne.s32.totalorder %s60, %s76
      %p78 = scmp.eq.s32.totalorder %s17, 0
      %p79 = por %p77, %p78
      %s80 = ssub.s32 %s18, %s30
      %p81 = scmp.eq.s32.totalorder %s80, 0
      %s83 = sadd.s32 %s82, 1
      %s84 = scalar_select %p81, %s82, %s83
      %p87 = pneg %p81
      %p88 = scmp.eq.s32.totalorder %s11, 1
      %p89 = por %p87, %p88
      %p90 = scmp.ne.s32.totalorder %s82, %s85
      %p91 = scmp.eq.s32.totalorder %s11, 0
      %p92 = por %p90, %p91
      %p93 = scmp.ne.s32.totalorder %s82, %s85
      %p94 = scmp.eq.s32.totalorder %s16, 1
      %p95 = por %p93, %p94
      %p96 = scmp.ne.s32.totalorder %s85, %s86
      %p97 = scmp.eq.s32.totalorder %s16, 0
      %p98 = por %p96, %p97
      %p99 = scmp.ne.s32.totalorder %s85, %s86
      %p100 = scmp.eq.s32.totalorder %s17, 1
      %p101 = por %p99, %p100
      %p103 = scmp.ne.s32.totalorder %s86, %s102
      %p104 = scmp.eq.s32.totalorder %s17, 0
      %p105 = por %p103, %p104
      %p106 = scmp.le.s32.totalorder 1, %s11
      %p107 = scmp.lt.s32.totalorder %s11, 3
      %p108 = pnand %p106, %p107
      %p109 = pneg %p108
      // Predicated region
      $region9: #{_zca_forward_impl.1} parent=5 // pred_check
        _
      $region10: #{_zca_forward_impl.1} parent=5 // pred_check_branch
        %111 = sbr.rel (%p108) target = $region12
      $region11: #{_zca_forward_impl.1} parent=5 // pred_region
        %s112 = ssub.s32 %s11, 1
        // Predicated region
        $region13: #{_zca_forward_impl.1} parent=11 // pred_check
          %p113 = pneg %p44
        $region14: #{_zca_forward_impl.1} parent=11 // pred_check_branch
          %115 = sbr.rel (%p113) target = $region16
        $region15: #{_zca_forward_impl.1} parent=11 // pred_region
          _
        $region16: #{_zca_forward_impl.1} parent=11 // pred_fallthru
          _
      $region12: #{_zca_forward_impl.1} parent=5 // pred_fallthru
        _
      %p116 = scmp.lt.s32.totalorder %s11, 2
      // Predicated region
      $region17: #{_zca_forward_impl.1} parent=5 // pred_check
        %p117 = pneg %p116
      $region18: #{_zca_forward_impl.1} parent=5 // pred_check_branch
        %119 = sbr.rel (%p117) target = $region20
      $region19: #{_zca_forward_impl.1} parent=5 // pred_region
        // Predicated region
        $region21: #{_zca_forward_impl.1} parent=19 // pred_check
          %p120 = pneg %p66
        $region22: #{_zca_forward_impl.1} parent=19 // pred_check_branch
          %122 = sbr.rel (%p120) target = $region24
        $region23: #{_zca_forward_impl.1} parent=19 // pred_region
          %s123 = sand.u32 %s56, 1
          %s124 = scalar_lea.sflag [#allocation3], %s123
          %s125 = sand.u32 %s56, 1
          %s126 = smul.addr %s125, 2048
          %s127 = scalar_lea.vmem [#allocation2], %s126
          %s128 = smul.u32 128, %s19
          %s129 = smul.u32 4, %s18
          %s131 = ssub.s32 32768, 32768
          %132 = vsyncadd %s124, %s131
          %s133 = smul.addr %s128, 8
          %s134 = sadd.s32 %s129, %s133
          %s135 = smul.addr %s134, 64
          %s136 = scalar_lea.hbm %s1, %s135
          %s137 = sshll.u32 %s127, 4
          %s138 = int_to_ptr.vmem [resolvable:$true] %s137
          %143 = dma.hbm_to_vmem [thread:$0]  %s136, 32768, %s138, %s124, 512, 256, 16
        $region24: #{_zca_forward_impl.1} parent=19 // pred_fallthru
          _
      $region20: #{_zca_forward_impl.1} parent=5 // pred_fallthru
        _
      %p144 = scmp.le.s32.totalorder 1, %s11
      %p145 = scmp.lt.s32.totalorder %s11, 3
      %p146 = pnand %p144, %p145
      %p147 = pneg %p146
      // Predicated region
      $region25: #{_zca_forward_impl.1} parent=5 // pred_check
        _
      $region26: #{_zca_forward_impl.1} parent=5 // pred_check_branch
        %149 = sbr.rel (%p146) target = $region28
      $region27: #{_zca_forward_impl.1} parent=5 // pred_region
        %s150 = ssub.s32 %s11, 1
        %s151 = sand.u32 %s59, 1
        %s152 = scalar_lea.sflag [#allocation3], %s151
        %s153 = sand.u32 %s59, 1
        %s154 = smul.addr %s153, 2048
        %s155 = scalar_lea.vmem [#allocation2], %s154
        // Predicated region
        $region29: #{_zca_forward_impl.1} parent=27 // pred_check
          %p156 = pneg %p72
        $region30: #{_zca_forward_impl.1} parent=27 // pred_check_branch
          %158 = sbr.rel (%p156) target = $region32
        $region31: #{_zca_forward_impl.1} parent=27 // pred_region
          %159 = dma.done %s152, 32768
        $region32: #{_zca_forward_impl.1} parent=27 // pred_fallthru
          _
        %p160 = pneg %p44
        %p161 = pneg %p41
        %s162 = sand.u32 %s59, 1
        %s163 = scalar_lea.sflag [#allocation3], %s162
        %s164 = sand.u32 %s59, 1
        %s165 = smul.addr %s164, 2048
        %s166 = scalar_lea.vmem [#allocation2], %s165
        %p167 = pneg %p72
        %p168 = pneg %p69
        %p169 = pneg %p98
        %p170 = pneg %p95
        %s171 = smul.u32 4, %s20
        %p172 = scmp.lt.s32.totalorder %s171, 7
        %s173 = scalar_select %p172, %s171, 7
        %s174 = smul.addr %s173, 2
        %s175 = scalar_lea.vmem %s2, %s174
        %s176 = smul.u32 128, %s21
        %s177 = smul.u32 4, %s20
        %s178 = smul.u32 4, %s20
        %p179 = scmp.lt.s32.totalorder %s178, 7
        %s180 = scalar_select %p179, %s178, 7
        %s181 = smul.addr %s180, 2
        %s182 = scalar_lea.vmem %s2, %s181
        %s183 = smul.u32 4, %s20
        %p184 = scmp.eq.s32.totalorder %s21, 0
        // Predicated region
        $region33: #{_zca_forward_impl.1} parent=27 // pred_check
          %p185 = pneg %p184
        $region34: #{_zca_forward_impl.1} parent=27 // pred_check_branch
          %187 = sbr.rel (%p185) target = $region36
        $region35: #{_zca_forward_impl.1} parent=27 // pred_region
          %188 = vst [vmem:[%s182] sm:$0xff] 0.0
        $region36: #{_zca_forward_impl.1} parent=27 // pred_fallthru
          _
        %s189 = smul.u32 %s21, 1024
        %v190 = vld [vmem:[%s182] sm:$0xff]
        %s191 = sshra.s32 %s189, 7
        %s192 = sand.u32 %s189, 127
        %s193 = scalar_lea.vmem %s0, %s191
        %v194 = vld [vmem:[%s193] sm:$0xff]
        %v195 = vld [vmem:[%s155] sm:$0xff]
        %v196 = vld [vmem:[%s155 + $0x8] sm:$0xff]
        %v197 = vld [vmem:[%s155 + $0x10] sm:$0xff]
        %v198 = vld [vmem:[%s155 + $0x18] sm:$0xff]
        %v199 = vld [vmem:[%s155 + $0x20] sm:$0xff]
        %v200 = vld [vmem:[%s155 + $0x28] sm:$0xff]
        %v201 = vld [vmem:[%s155 + $0x30] sm:$0xff]
        %v202 = vld [vmem:[%s155 + $0x38] sm:$0xff]
        %v203 = vld [vmem:[%s155 + $0x40] sm:$0xff]
        %v204 = vld [vmem:[%s155 + $0x48] sm:$0xff]
        %v205 = vld [vmem:[%s155 + $0x50] sm:$0xff]
        %v206 = vld [vmem:[%s155 + $0x58] sm:$0xff]
        %v207 = vld [vmem:[%s155 + $0x60] sm:$0xff]
        %v208 = vld [vmem:[%s155 + $0x68] sm:$0xff]
        %v209 = vld [vmem:[%s155 + $0x70] sm:$0xff]
        %v210 = vld [vmem:[%s155 + $0x78] sm:$0xff]
        %v211 = vld [vmem:[%s155 + $0x80] sm:$0xff]
        %v212 = vld [vmem:[%s155 + $0x88] sm:$0xff]
        %v213 = vld [vmem:[%s155 + $0x90] sm:$0xff]
        %v214 = vld [vmem:[%s155 + $0x98] sm:$0xff]
        %v215 = vld [vmem:[%s155 + $0xa0] sm:$0xff]
        %v216 = vld [vmem:[%s155 + $0xa8] sm:$0xff]
        %v217 = vld [vmem:[%s155 + $0xb0] sm:$0xff]
        %v218 = vld [vmem:[%s155 + $0xb8] sm:$0xff]
        %v219 = vld [vmem:[%s155 + $0xc0] sm:$0xff]
        %v220 = vld [vmem:[%s155 + $0xc8] sm:$0xff]
        %v221 = vld [vmem:[%s155 + $0xd0] sm:$0xff]
        %v222 = vld [vmem:[%s155 + $0xd8] sm:$0xff]
        %v223 = vld [vmem:[%s155 + $0xe0] sm:$0xff]
        %v224 = vld [vmem:[%s155 + $0xe8] sm:$0xff]
        %v225 = vld [vmem:[%s155 + $0xf0] sm:$0xff]
        %v226 = vld [vmem:[%s155 + $0xf8] sm:$0xff]
        %v227 = vld [vmem:[%s155 + $0x100] sm:$0xff]
        %v228 = vld [vmem:[%s155 + $0x108] sm:$0xff]
        %v229 = vld [vmem:[%s155 + $0x110] sm:$0xff]
        %v230 = vld [vmem:[%s155 + $0x118] sm:$0xff]
        %v231 = vld [vmem:[%s155 + $0x120] sm:$0xff]
        %v232 = vld [vmem:[%s155 + $0x128] sm:$0xff]
        %v233 = vld [vmem:[%s155 + $0x130] sm:$0xff]
        %v234 = vld [vmem:[%s155 + $0x138] sm:$0xff]
        %v235 = vld [vmem:[%s155 + $0x140] sm:$0xff]
        %v236 = vld [vmem:[%s155 + $0x148] sm:$0xff]
        %v237 = vld [vmem:[%s155 + $0x150] sm:$0xff]
        %v238 = vld [vmem:[%s155 + $0x158] sm:$0xff]
        %v239 = vld [vmem:[%s155 + $0x160] sm:$0xff]
        %v240 = vld [vmem:[%s155 + $0x168] sm:$0xff]
        %v241 = vld [vmem:[%s155 + $0x170] sm:$0xff]
        %v242 = vld [vmem:[%s155 + $0x178] sm:$0xff]
        %v243 = vld [vmem:[%s155 + $0x180] sm:$0xff]
        %v244 = vld [vmem:[%s155 + $0x188] sm:$0xff]
        %v245 = vld [vmem:[%s155 + $0x190] sm:$0xff]
        %v246 = vld [vmem:[%s155 + $0x198] sm:$0xff]
        %v247 = vld [vmem:[%s155 + $0x1a0] sm:$0xff]
        %v248 = vld [vmem:[%s155 + $0x1a8] sm:$0xff]
        %v249 = vld [vmem:[%s155 + $0x1b0] sm:$0xff]
        %v250 = vld [vmem:[%s155 + $0x1b8] sm:$0xff]
        %v251 = vld [vmem:[%s155 + $0x1c0] sm:$0xff]
        %v252 = vld [vmem:[%s155 + $0x1c8] sm:$0xff]
        %v253 = vld [vmem:[%s155 + $0x1d0] sm:$0xff]
        %v254 = vld [vmem:[%s155 + $0x1d8] sm:$0xff]
        %v255 = vld [vmem:[%s155 + $0x1e0] sm:$0xff]
        %v256 = vld [vmem:[%s155 + $0x1e8] sm:$0xff]
        %v257 = vld [vmem:[%s155 + $0x1f0] sm:$0xff]
        %v258 = vld [vmem:[%s155 + $0x1f8] sm:$0xff]
        %v259 = vld [vmem:[%s155 + $0x200] sm:$0xff]
        %v260 = vld [vmem:[%s155 + $0x208] sm:$0xff]
        %v261 = vld [vmem:[%s155 + $0x210] sm:$0xff]
        %v262 = vld [vmem:[%s155 + $0x218] sm:$0xff]
        %v263 = vld [vmem:[%s155 + $0x220] sm:$0xff]
        %v264 = vld [vmem:[%s155 + $0x228] sm:$0xff]
        %v265 = vld [vmem:[%s155 + $0x230] sm:$0xff]
        %v266 = vld [vmem:[%s155 + $0x238] sm:$0xff]
        %v267 = vld [vmem:[%s155 + $0x240] sm:$0xff]
        %v268 = vld [vmem:[%s155 + $0x248] sm:$0xff]
        %v269 = vld [vmem:[%s155 + $0x250] sm:$0xff]
        %v270 = vld [vmem:[%s155 + $0x258] sm:$0xff]
        %v271 = vld [vmem:[%s155 + $0x260] sm:$0xff]
        %v272 = vld [vmem:[%s155 + $0x268] sm:$0xff]
        %v273 = vld [vmem:[%s155 + $0x270] sm:$0xff]
        %v274 = vld [vmem:[%s155 + $0x278] sm:$0xff]
        %v275 = vld [vmem:[%s155 + $0x280] sm:$0xff]
        %v276 = vld [vmem:[%s155 + $0x288] sm:$0xff]
        %v277 = vld [vmem:[%s155 + $0x290] sm:$0xff]
        %v278 = vld [vmem:[%s155 + $0x298] sm:$0xff]
        %v279 = vld [vmem:[%s155 + $0x2a0] sm:$0xff]
        %v280 = vld [vmem:[%s155 + $0x2a8] sm:$0xff]
        %v281 = vld [vmem:[%s155 + $0x2b0] sm:$0xff]
        %v282 = vld [vmem:[%s155 + $0x2b8] sm:$0xff]
        %v283 = vld [vmem:[%s155 + $0x2c0] sm:$0xff]
        %v284 = vld [vmem:[%s155 + $0x2c8] sm:$0xff]
        %v285 = vld [vmem:[%s155 + $0x2d0] sm:$0xff]
        %v286 = vld [vmem:[%s155 + $0x2d8] sm:$0xff]
        %v287 = vld [vmem:[%s155 + $0x2e0] sm:$0xff]
        %v288 = vld [vmem:[%s155 + $0x2e8] sm:$0xff]
        %v289 = vld [vmem:[%s155 + $0x2f0] sm:$0xff]
        %v290 = vld [vmem:[%s155 + $0x2f8] sm:$0xff]
        %v291 = vld [vmem:[%s155 + $0x300] sm:$0xff]
        %v292 = vld [vmem:[%s155 + $0x308] sm:$0xff]
        %v293 = vld [vmem:[%s155 + $0x310] sm:$0xff]
        %v294 = vld [vmem:[%s155 + $0x318] sm:$0xff]
        %v295 = vld [vmem:[%s155 + $0x320] sm:$0xff]
        %v296 = vld [vmem:[%s155 + $0x328] sm:$0xff]
        %v297 = vld [vmem:[%s155 + $0x330] sm:$0xff]
        %v298 = vld [vmem:[%s155 + $0x338] sm:$0xff]
        %v299 = vld [vmem:[%s155 + $0x340] sm:$0xff]
        %v300 = vld [vmem:[%s155 + $0x348] sm:$0xff]
        %v301 = vld [vmem:[%s155 + $0x350] sm:$0xff]
        %v302 = vld [vmem:[%s155 + $0x358] sm:$0xff]
        %v303 = vld [vmem:[%s155 + $0x360] sm:$0xff]
        %v304 = vld [vmem:[%s155 + $0x368] sm:$0xff]
        %v305 = vld [vmem:[%s155 + $0x370] sm:$0xff]
        %v306 = vld [vmem:[%s155 + $0x378] sm:$0xff]
        %v307 = vld [vmem:[%s155 + $0x380] sm:$0xff]
        %v308 = vld [vmem:[%s155 + $0x388] sm:$0xff]
        %v309 = vld [vmem:[%s155 + $0x390] sm:$0xff]
        %v310 = vld [vmem:[%s155 + $0x398] sm:$0xff]
        %v311 = vld [vmem:[%s155 + $0x3a0] sm:$0xff]
        %v312 = vld [vmem:[%s155 + $0x3a8] sm:$0xff]
        %v313 = vld [vmem:[%s155 + $0x3b0] sm:$0xff]
        %v314 = vld [vmem:[%s155 + $0x3b8] sm:$0xff]
        %v315 = vld [vmem:[%s155 + $0x3c0] sm:$0xff]
        %v316 = vld [vmem:[%s155 + $0x3c8] sm:$0xff]
        %v317 = vld [vmem:[%s155 + $0x3d0] sm:$0xff]
        %v318 = vld [vmem:[%s155 + $0x3d8] sm:$0xff]
        %v319 = vld [vmem:[%s155 + $0x3e0] sm:$0xff]
        %v320 = vld [vmem:[%s155 + $0x3e8] sm:$0xff]
        %v321 = vld [vmem:[%s155 + $0x3f0] sm:$0xff]
        %v322 = vld [vmem:[%s155 + $0x3f8] sm:$0xff]
        %v323 = vld [vmem:[%s155 + $0x400] sm:$0xff]
        %v324 = vld [vmem:[%s155 + $0x408] sm:$0xff]
        %v325 = vld [vmem:[%s155 + $0x410] sm:$0xff]
        %v326 = vld [vmem:[%s155 + $0x418] sm:$0xff]
        %v327 = vld [vmem:[%s155 + $0x420] sm:$0xff]
        %v328 = vld [vmem:[%s155 + $0x428] sm:$0xff]
        %v329 = vld [vmem:[%s155 + $0x430] sm:$0xff]
        %v330 = vld [vmem:[%s155 + $0x438] sm:$0xff]
        %v331 = vld [vmem:[%s155 + $0x440] sm:$0xff]
        %v332 = vld [vmem:[%s155 + $0x448] sm:$0xff]
        %v333 = vld [vmem:[%s155 + $0x450] sm:$0xff]
        %v334 = vld [vmem:[%s155 + $0x458] sm:$0xff]
        %v335 = vld [vmem:[%s155 + $0x460] sm:$0xff]
        %v336 = vld [vmem:[%s155 + $0x468] sm:$0xff]
        %v337 = vld [vmem:[%s155 + $0x470] sm:$0xff]
        %v338 = vld [vmem:[%s155 + $0x478] sm:$0xff]
        %v339 = vld [vmem:[%s155 + $0x480] sm:$0xff]
        %v340 = vld [vmem:[%s155 + $0x488] sm:$0xff]
        %v341 = vld [vmem:[%s155 + $0x490] sm:$0xff]
        %v342 = vld [vmem:[%s155 + $0x498] sm:$0xff]
        %v343 = vld [vmem:[%s155 + $0x4a0] sm:$0xff]
        %v344 = vld [vmem:[%s155 + $0x4a8] sm:$0xff]
        %v345 = vld [vmem:[%s155 + $0x4b0] sm:$0xff]
        %v346 = vld [vmem:[%s155 + $0x4b8] sm:$0xff]
        %v347 = vld [vmem:[%s155 + $0x4c0] sm:$0xff]
        %v348 = vld [vmem:[%s155 + $0x4c8] sm:$0xff]
        %v349 = vld [vmem:[%s155 + $0x4d0] sm:$0xff]
        %v350 = vld [vmem:[%s155 + $0x4d8] sm:$0xff]
        %v351 = vld [vmem:[%s155 + $0x4e0] sm:$0xff]
        %v352 = vld [vmem:[%s155 + $0x4e8] sm:$0xff]
        %v353 = vld [vmem:[%s155 + $0x4f0] sm:$0xff]
        %v354 = vld [vmem:[%s155 + $0x4f8] sm:$0xff]
        %v355 = vld [vmem:[%s155 + $0x500] sm:$0xff]
        %v356 = vld [vmem:[%s155 + $0x508] sm:$0xff]
        %v357 = vld [vmem:[%s155 + $0x510] sm:$0xff]
        %v358 = vld [vmem:[%s155 + $0x518] sm:$0xff]
        %v359 = vld [vmem:[%s155 + $0x520] sm:$0xff]
        %v360 = vld [vmem:[%s155 + $0x528] sm:$0xff]
        %v361 = vld [vmem:[%s155 + $0x530] sm:$0xff]
        %v362 = vld [vmem:[%s155 + $0x538] sm:$0xff]
        %v363 = vld [vmem:[%s155 + $0x540] sm:$0xff]
        %v364 = vld [vmem:[%s155 + $0x548] sm:$0xff]
        %v365 = vld [vmem:[%s155 + $0x550] sm:$0xff]
        %v366 = vld [vmem:[%s155 + $0x558] sm:$0xff]
        %v367 = vld [vmem:[%s155 + $0x560] sm:$0xff]
        %v368 = vld [vmem:[%s155 + $0x568] sm:$0xff]
        %v369 = vld [vmem:[%s155 + $0x570] sm:$0xff]
        %v370 = vld [vmem:[%s155 + $0x578] sm:$0xff]
        %v371 = vld [vmem:[%s155 + $0x580] sm:$0xff]
        %v372 = vld [vmem:[%s155 + $0x588] sm:$0xff]
        %v373 = vld [vmem:[%s155 + $0x590] sm:$0xff]
        %v374 = vld [vmem:[%s155 + $0x598] sm:$0xff]
        %v375 = vld [vmem:[%s155 + $0x5a0] sm:$0xff]
        %v376 = vld [vmem:[%s155 + $0x5a8] sm:$0xff]
        %v377 = vld [vmem:[%s155 + $0x5b0] sm:$0xff]
        %v378 = vld [vmem:[%s155 + $0x5b8] sm:$0xff]
        %v379 = vld [vmem:[%s155 + $0x5c0] sm:$0xff]
        %v380 = vld [vmem:[%s155 + $0x5c8] sm:$0xff]
        %v381 = vld [vmem:[%s155 + $0x5d0] sm:$0xff]
        %v382 = vld [vmem:[%s155 + $0x5d8] sm:$0xff]
        %v383 = vld [vmem:[%s155 + $0x5e0] sm:$0xff]
        %v384 = vld [vmem:[%s155 + $0x5e8] sm:$0xff]
        %v385 = vld [vmem:[%s155 + $0x5f0] sm:$0xff]
        %v386 = vld [vmem:[%s155 + $0x5f8] sm:$0xff]
        %v387 = vld [vmem:[%s155 + $0x600] sm:$0xff]
        %v388 = vld [vmem:[%s155 + $0x608] sm:$0xff]
        %v389 = vld [vmem:[%s155 + $0x610] sm:$0xff]
        %v390 = vld [vmem:[%s155 + $0x618] sm:$0xff]
        %v391 = vld [vmem:[%s155 + $0x620] sm:$0xff]
        %v392 = vld [vmem:[%s155 + $0x628] sm:$0xff]
        %v393 = vld [vmem:[%s155 + $0x630] sm:$0xff]
        %v394 = vld [vmem:[%s155 + $0x638] sm:$0xff]
        %v395 = vld [vmem:[%s155 + $0x640] sm:$0xff]
        %v396 = vld [vmem:[%s155 + $0x648] sm:$0xff]
        %v397 = vld [vmem:[%s155 + $0x650] sm:$0xff]
        %v398 = vld [vmem:[%s155 + $0x658] sm:$0xff]
        %v399 = vld [vmem:[%s155 + $0x660] sm:$0xff]
        %v400 = vld [vmem:[%s155 + $0x668] sm:$0xff]
        %v401 = vld [vmem:[%s155 + $0x670] sm:$0xff]
        %v402 = vld [vmem:[%s155 + $0x678] sm:$0xff]
        %v403 = vld [vmem:[%s155 + $0x680] sm:$0xff]
        %v404 = vld [vmem:[%s155 + $0x688] sm:$0xff]
        %v405 = vld [vmem:[%s155 + $0x690] sm:$0xff]
        %v406 = vld [vmem:[%s155 + $0x698] sm:$0xff]
        %v407 = vld [vmem:[%s155 + $0x6a0] sm:$0xff]
        %v408 = vld [vmem:[%s155 + $0x6a8] sm:$0xff]
        %v409 = vld [vmem:[%s155 + $0x6b0] sm:$0xff]
        %v410 = vld [vmem:[%s155 + $0x6b8] sm:$0xff]
        %v411 = vld [vmem:[%s155 + $0x6c0] sm:$0xff]
        %v412 = vld [vmem:[%s155 + $0x6c8] sm:$0xff]
        %v413 = vld [vmem:[%s155 + $0x6d0] sm:$0xff]
        %v414 = vld [vmem:[%s155 + $0x6d8] sm:$0xff]
        %v415 = vld [vmem:[%s155 + $0x6e0] sm:$0xff]
        %v416 = vld [vmem:[%s155 + $0x6e8] sm:$0xff]
        %v417 = vld [vmem:[%s155 + $0x6f0] sm:$0xff]
        %v418 = vld [vmem:[%s155 + $0x6f8] sm:$0xff]
        %v419 = vld [vmem:[%s155 + $0x700] sm:$0xff]
        %v420 = vld [vmem:[%s155 + $0x708] sm:$0xff]
        %v421 = vld [vmem:[%s155 + $0x710] sm:$0xff]
        %v422 = vld [vmem:[%s155 + $0x718] sm:$0xff]
        %v423 = vld [vmem:[%s155 + $0x720] sm:$0xff]
        %v424 = vld [vmem:[%s155 + $0x728] sm:$0xff]
        %v425 = vld [vmem:[%s155 + $0x730] sm:$0xff]
        %v426 = vld [vmem:[%s155 + $0x738] sm:$0xff]
        %v427 = vld [vmem:[%s155 + $0x740] sm:$0xff]
        %v428 = vld [vmem:[%s155 + $0x748] sm:$0xff]
        %v429 = vld [vmem:[%s155 + $0x750] sm:$0xff]
        %v430 = vld [vmem:[%s155 + $0x758] sm:$0xff]
        %v431 = vld [vmem:[%s155 + $0x760] sm:$0xff]
        %v432 = vld [vmem:[%s155 + $0x768] sm:$0xff]
        %v433 = vld [vmem:[%s155 + $0x770] sm:$0xff]
        %v434 = vld [vmem:[%s155 + $0x778] sm:$0xff]
        %v435 = vld [vmem:[%s155 + $0x780] sm:$0xff]
        %v436 = vld [vmem:[%s155 + $0x788] sm:$0xff]
        %v437 = vld [vmem:[%s155 + $0x790] sm:$0xff]
        %v438 = vld [vmem:[%s155 + $0x798] sm:$0xff]
        %v439 = vld [vmem:[%s155 + $0x7a0] sm:$0xff]
        %v440 = vld [vmem:[%s155 + $0x7a8] sm:$0xff]
        %v441 = vld [vmem:[%s155 + $0x7b0] sm:$0xff]
        %v442 = vld [vmem:[%s155 + $0x7b8] sm:$0xff]
        %v443 = vld [vmem:[%s155 + $0x7c0] sm:$0xff]
        %v444 = vld [vmem:[%s155 + $0x7c8] sm:$0xff]
        %v445 = vld [vmem:[%s155 + $0x7d0] sm:$0xff]
        %v446 = vld [vmem:[%s155 + $0x7d8] sm:$0xff]
        %v447 = vld [vmem:[%s155 + $0x7e0] sm:$0xff]
        %v448 = vld [vmem:[%s155 + $0x7e8] sm:$0xff]
        %v449 = vld [vmem:[%s155 + $0x7f0] sm:$0xff]
        %v450 = vld [vmem:[%s155 + $0x7f8] sm:$0xff]
        %v452 = vcombine.high %v194, %v194
        %v454 = vunpack.c.l.s4 1966171168
        %v455 = vunpack.c.0.s8 %v454
        %v456 = vlaneseq
        %v457 = vshrl.u32 %v456, 7
        %v458 = vsub.s32 %v455, %v457
        %v459 = vrot.slane %v194, %v458
        %v461 = vunpack.c.l.s4 1966171168
        %v462 = vunpack.c.0.s8 %v461
        %v463 = vlaneseq
        %v464 = vshrl.u32 %v463, 7
        %v465 = vsub.s32 %v462, %v464
        %v466 = vrot.slane %v452, %v465
        %v467 = vcombine.high %v459, %v459
        %v468 = vcombine.high %v466, %v466
        %v470 = vunpack.c.l.s4 1966171168
        %v471 = vunpack.c.0.s8 %v470
        %v472 = vlaneseq
        %v473 = vshrl.u32 %v472, 7
        %v474 = vsub.s32 %v471, %v473
        %v475 = vrot.slane %v459, %v474
        %v477 = vunpack.c.l.s4 1966171168
        %v478 = vunpack.c.0.s8 %v477
        %v479 = vlaneseq
        %v480 = vshrl.u32 %v479, 7
        %v481 = vsub.s32 %v478, %v480
        %v482 = vrot.slane %v466, %v481
        %v484 = vunpack.c.l.s4 1966171168
        %v485 = vunpack.c.0.s8 %v484
        %v486 = vlaneseq
        %v487 = vshrl.u32 %v486, 7
        %v488 = vsub.s32 %v485, %v487
        %v489 = vrot.slane %v467, %v488
        %v491 = vunpack.c.l.s4 1966171168
        %v492 = vunpack.c.0.s8 %v491
        %v493 = vlaneseq
        %v494 = vshrl.u32 %v493, 7
        %v495 = vsub.s32 %v492, %v494
        %v496 = vrot.slane %v468, %v495
        %v497 = vcombine.high %v475, %v475
        %v498 = vcombine.high %v482, %v482
        %v499 = vcombine.high %v489, %v489
        %v500 = vcombine.high %v496, %v496
        %v765 = vunpack.c.l.b16 %v195
        %v766 = vunpack.c.h.b16 %v195
        %v767 = vunpack.c.l.b16 %v196
        %v768 = vunpack.c.h.b16 %v196
        %v769 = vunpack.c.l.b16 %v197
        %v770 = vunpack.c.h.b16 %v197
        %v771 = vunpack.c.l.b16 %v198
        %v772 = vunpack.c.h.b16 %v198
        %v773 = vunpack.c.l.b16 %v199
        %v774 = vunpack.c.h.b16 %v199
        %v775 = vunpack.c.l.b16 %v200
        %v776 = vunpack.c.h.b16 %v200
        %v777 = vunpack.c.l.b16 %v201
        %v778 = vunpack.c.h.b16 %v201
        %v779 = vunpack.c.l.b16 %v202
        %v780 = vunpack.c.h.b16 %v202
        %v781 = vunpack.c.l.b16 %v203
        %v782 = vunpack.c.h.b16 %v203
        %v783 = vunpack.c.l.b16 %v204
        %v784 = vunpack.c.h.b16 %v204
        %v785 = vunpack.c.l.b16 %v205
        %v786 = vunpack.c.h.b16 %v205
        %v787 = vunpack.c.l.b16 %v206
        %v788 = vunpack.c.h.b16 %v206
        %v789 = vunpack.c.l.b16 %v207
        %v790 = vunpack.c.h.b16 %v207
        %v791 = vunpack.c.l.b16 %v208
        %v792 = vunpack.c.h.b16 %v208
        %v793 = vunpack.c.l.b16 %v209
        %v794 = vunpack.c.h.b16 %v209
        %v795 = vunpack.c.l.b16 %v210
        %v796 = vunpack.c.h.b16 %v210
        %v797 = vunpack.c.l.b16 %v211
        %v798 = vunpack.c.h.b16 %v211
        %v799 = vunpack.c.l.b16 %v212
        %v800 = vunpack.c.h.b16 %v212
        %v801 = vunpack.c.l.b16 %v213
        %v802 = vunpack.c.h.b16 %v213
        %v803 = vunpack.c.l.b16 %v214
        %v804 = vunpack.c.h.b16 %v214
        %v805 = vunpack.c.l.b16 %v215
        %v806 = vunpack.c.h.b16 %v215
        %v807 = vunpack.c.l.b16 %v216
        %v808 = vunpack.c.h.b16 %v216
        %v809 = vunpack.c.l.b16 %v217
        %v810 = vunpack.c.h.b16 %v217
        %v811 = vunpack.c.l.b16 %v218
        %v812 = vunpack.c.h.b16 %v218
        %v813 = vunpack.c.l.b16 %v219
        %v814 = vunpack.c.h.b16 %v219
        %v815 = vunpack.c.l.b16 %v220
        %v816 = vunpack.c.h.b16 %v220
        %v817 = vunpack.c.l.b16 %v221
        %v818 = vunpack.c.h.b16 %v221
        %v819 = vunpack.c.l.b16 %v222
        %v820 = vunpack.c.h.b16 %v222
        %v821 = vunpack.c.l.b16 %v223
        %v822 = vunpack.c.h.b16 %v223
        %v823 = vunpack.c.l.b16 %v224
        %v824 = vunpack.c.h.b16 %v224
        %v825 = vunpack.c.l.b16 %v225
        %v826 = vunpack.c.h.b16 %v225
        %v827 = vunpack.c.l.b16 %v226
        %v828 = vunpack.c.h.b16 %v226
        %v829 = vunpack.c.l.b16 %v227
        %v830 = vunpack.c.h.b16 %v227
        %v831 = vunpack.c.l.b16 %v228
        %v832 = vunpack.c.h.b16 %v228
        %v833 = vunpack.c.l.b16 %v229
        %v834 = vunpack.c.h.b16 %v229
        %v835 = vunpack.c.l.b16 %v230
        %v836 = vunpack.c.h.b16 %v230
        %v837 = vunpack.c.l.b16 %v231
        %v838 = vunpack.c.h.b16 %v231
        %v839 = vunpack.c.l.b16 %v232
        %v840 = vunpack.c.h.b16 %v232
        %v841 = vunpack.c.l.b16 %v233
        %v842 = vunpack.c.h.b16 %v233
        %v843 = vunpack.c.l.b16 %v234
        %v844 = vunpack.c.h.b16 %v234
        %v845 = vunpack.c.l.b16 %v235
        %v846 = vunpack.c.h.b16 %v235
        %v847 = vunpack.c.l.b16 %v236
        %v848 = vunpack.c.h.b16 %v236
        %v849 = vunpack.c.l.b16 %v237
        %v850 = vunpack.c.h.b16 %v237
        %v851 = vunpack.c.l.b16 %v238
        %v852 = vunpack.c.h.b16 %v238
        %v853 = vunpack.c.l.b16 %v239
        %v854 = vunpack.c.h.b16 %v239
        %v855 = vunpack.c.l.b16 %v240
        %v856 = vunpack.c.h.b16 %v240
        %v857 = vunpack.c.l.b16 %v241
        %v858 = vunpack.c.h.b16 %v241
        %v859 = vunpack.c.l.b16 %v242
        %v860 = vunpack.c.h.b16 %v242
        %v861 = vunpack.c.l.b16 %v243
        %v862 = vunpack.c.h.b16 %v243
        %v863 = vunpack.c.l.b16 %v244
        %v864 = vunpack.c.h.b16 %v244
        %v865 = vunpack.c.l.b16 %v245
        %v866 = vunpack.c.h.b16 %v245
        %v867 = vunpack.c.l.b16 %v246
        %v868 = vunpack.c.h.b16 %v246
        %v869 = vunpack.c.l.b16 %v247
        %v870 = vunpack.c.h.b16 %v247
        %v871 = vunpack.c.l.b16 %v248
        %v872 = vunpack.c.h.b16 %v248
        %v873 = vunpack.c.l.b16 %v249
        %v874 = vunpack.c.h.b16 %v249
        %v875 = vunpack.c.l.b16 %v250
        %v876 = vunpack.c.h.b16 %v250
        %v877 = vunpack.c.l.b16 %v251
        %v878 = vunpack.c.h.b16 %v251
        %v879 = vunpack.c.l.b16 %v252
        %v880 = vunpack.c.h.b16 %v252
        %v881 = vunpack.c.l.b16 %v253
        %v882 = vunpack.c.h.b16 %v253
        %v883 = vunpack.c.l.b16 %v254
        %v884 = vunpack.c.h.b16 %v254
        %v885 = vunpack.c.l.b16 %v255
        %v886 = vunpack.c.h.b16 %v255
        %v887 = vunpack.c.l.b16 %v256
        %v888 = vunpack.c.h.b16 %v256
        %v889 = vunpack.c.l.b16 %v257
        %v890 = vunpack.c.h.b16 %v257
        %v891 = vunpack.c.l.b16 %v258
        %v892 = vunpack.c.h.b16 %v258
        %v893 = vunpack.c.l.b16 %v259
        %v894 = vunpack.c.h.b16 %v259
        %v895 = vunpack.c.l.b16 %v260
        %v896 = vunpack.c.h.b16 %v260
        %v897 = vunpack.c.l.b16 %v261
        %v898 = vunpack.c.h.b16 %v261
        %v899 = vunpack.c.l.b16 %v262
        %v900 = vunpack.c.h.b16 %v262
        %v901 = vunpack.c.l.b16 %v263
        %v902 = vunpack.c.h.b16 %v263
        %v903 = vunpack.c.l.b16 %v264
        %v904 = vunpack.c.h.b16 %v264
        %v905 = vunpack.c.l.b16 %v265
        %v906 = vunpack.c.h.b16 %v265
        %v907 = vunpack.c.l.b16 %v266
        %v908 = vunpack.c.h.b16 %v266
        %v909 = vunpack.c.l.b16 %v267
        %v910 = vunpack.c.h.b16 %v267
        %v911 = vunpack.c.l.b16 %v268
        %v912 = vunpack.c.h.b16 %v268
        %v913 = vunpack.c.l.b16 %v269
        %v914 = vunpack.c.h.b16 %v269
        %v915 = vunpack.c.l.b16 %v270
        %v916 = vunpack.c.h.b16 %v270
        %v917 = vunpack.c.l.b16 %v271
        %v918 = vunpack.c.h.b16 %v271
        %v919 = vunpack.c.l.b16 %v272
        %v920 = vunpack.c.h.b16 %v272
        %v921 = vunpack.c.l.b16 %v273
        %v922 = vunpack.c.h.b16 %v273
        %v923 = vunpack.c.l.b16 %v274
        %v924 = vunpack.c.h.b16 %v274
        %v925 = vunpack.c.l.b16 %v275
        %v926 = vunpack.c.h.b16 %v275
        %v927 = vunpack.c.l.b16 %v276
        %v928 = vunpack.c.h.b16 %v276
        %v929 = vunpack.c.l.b16 %v277
        %v930 = vunpack.c.h.b16 %v277
        %v931 = vunpack.c.l.b16 %v278
        %v932 = vunpack.c.h.b16 %v278
        %v933 = vunpack.c.l.b16 %v279
        %v934 = vunpack.c.h.b16 %v279
        %v935 = vunpack.c.l.b16 %v280
        %v936 = vunpack.c.h.b16 %v280
        %v937 = vunpack.c.l.b16 %v281
        %v938 = vunpack.c.h.b16 %v281
        %v939 = vunpack.c.l.b16 %v282
        %v940 = vunpack.c.h.b16 %v282
        %v941 = vunpack.c.l.b16 %v283
        %v942 = vunpack.c.h.b16 %v283
        %v943 = vunpack.c.l.b16 %v284
        %v944 = vunpack.c.h.b16 %v284
        %v945 = vunpack.c.l.b16 %v285
        %v946 = vunpack.c.h.b16 %v285
        %v947 = vunpack.c.l.b16 %v286
        %v948 = vunpack.c.h.b16 %v286
        %v949 = vunpack.c.l.b16 %v287
        %v950 = vunpack.c.h.b16 %v287
        %v951 = vunpack.c.l.b16 %v288
        %v952 = vunpack.c.h.b16 %v288
        %v953 = vunpack.c.l.b16 %v289
        %v954 = vunpack.c.h.b16 %v289
        %v955 = vunpack.c.l.b16 %v290
        %v956 = vunpack.c.h.b16 %v290
        %v957 = vunpack.c.l.b16 %v291
        %v958 = vunpack.c.h.b16 %v291
        %v959 = vunpack.c.l.b16 %v292
        %v960 = vunpack.c.h.b16 %v292
        %v961 = vunpack.c.l.b16 %v293
        %v962 = vunpack.c.h.b16 %v293
        %v963 = vunpack.c.l.b16 %v294
        %v964 = vunpack.c.h.b16 %v294
        %v965 = vunpack.c.l.b16 %v295
        %v966 = vunpack.c.h.b16 %v295
        %v967 = vunpack.c.l.b16 %v296
        %v968 = vunpack.c.h.b16 %v296
        %v969 = vunpack.c.l.b16 %v297
        %v970 = vunpack.c.h.b16 %v297
        %v971 = vunpack.c.l.b16 %v298
        %v972 = vunpack.c.h.b16 %v298
        %v973 = vunpack.c.l.b16 %v299
        %v974 = vunpack.c.h.b16 %v299
        %v975 = vunpack.c.l.b16 %v300
        %v976 = vunpack.c.h.b16 %v300
        %v977 = vunpack.c.l.b16 %v301
        %v978 = vunpack.c.h.b16 %v301
        %v979 = vunpack.c.l.b16 %v302
        %v980 = vunpack.c.h.b16 %v302
        %v981 = vunpack.c.l.b16 %v303
        %v982 = vunpack.c.h.b16 %v303
        %v983 = vunpack.c.l.b16 %v304
        %v984 = vunpack.c.h.b16 %v304
        %v985 = vunpack.c.l.b16 %v305
        %v986 = vunpack.c.h.b16 %v305
        %v987 = vunpack.c.l.b16 %v306
        %v988 = vunpack.c.h.b16 %v306
        %v989 = vunpack.c.l.b16 %v307
        %v990 = vunpack.c.h.b16 %v307
        %v991 = vunpack.c.l.b16 %v308
        %v992 = vunpack.c.h.b16 %v308
        %v993 = vunpack.c.l.b16 %v309
        %v994 = vunpack.c.h.b16 %v309
        %v995 = vunpack.c.l.b16 %v310
        %v996 = vunpack.c.h.b16 %v310
        %v997 = vunpack.c.l.b16 %v311
        %v998 = vunpack.c.h.b16 %v311
        %v999 = vunpack.c.l.b16 %v312
        %v1000 = vunpack.c.h.b16 %v312
        %v1001 = vunpack.c.l.b16 %v313
        %v1002 = vunpack.c.h.b16 %v313
        %v1003 = vunpack.c.l.b16 %v314
        %v1004 = vunpack.c.h.b16 %v314
        %v1005 = vunpack.c.l.b16 %v315
        %v1006 = vunpack.c.h.b16 %v315
        %v1007 = vunpack.c.l.b16 %v316
        %v1008 = vunpack.c.h.b16 %v316
        %v1009 = vunpack.c.l.b16 %v317
        %v1010 = vunpack.c.h.b16 %v317
        %v1011 = vunpack.c.l.b16 %v318
        %v1012 = vunpack.c.h.b16 %v318
        %v1013 = vunpack.c.l.b16 %v319
        %v1014 = vunpack.c.h.b16 %v319
        %v1015 = vunpack.c.l.b16 %v320
        %v1016 = vunpack.c.h.b16 %v320
        %v1017 = vunpack.c.l.b16 %v321
        %v1018 = vunpack.c.h.b16 %v321
        %v1019 = vunpack.c.l.b16 %v322
        %v1020 = vunpack.c.h.b16 %v322
        %v1021 = vunpack.c.l.b16 %v323
        %v1022 = vunpack.c.h.b16 %v323
        %v1023 = vunpack.c.l.b16 %v324
        %v1024 = vunpack.c.h.b16 %v324
        %v1025 = vunpack.c.l.b16 %v325
        %v1026 = vunpack.c.h.b16 %v325
        %v1027 = vunpack.c.l.b16 %v326
        %v1028 = vunpack.c.h.b16 %v326
        %v1029 = vunpack.c.l.b16 %v327
        %v1030 = vunpack.c.h.b16 %v327
        %v1031 = vunpack.c.l.b16 %v328
        %v1032 = vunpack.c.h.b16 %v328
        %v1033 = vunpack.c.l.b16 %v329
        %v1034 = vunpack.c.h.b16 %v329
        %v1035 = vunpack.c.l.b16 %v330
        %v1036 = vunpack.c.h.b16 %v330
        %v1037 = vunpack.c.l.b16 %v331
        %v1038 = vunpack.c.h.b16 %v331
        %v1039 = vunpack.c.l.b16 %v332
        %v1040 = vunpack.c.h.b16 %v332
        %v1041 = vunpack.c.l.b16 %v333
        %v1042 = vunpack.c.h.b16 %v333
        %v1043 = vunpack.c.l.b16 %v334
        %v1044 = vunpack.c.h.b16 %v334
        %v1045 = vunpack.c.l.b16 %v335
        %v1046 = vunpack.c.h.b16 %v335
        %v1047 = vunpack.c.l.b16 %v336
        %v1048 = vunpack.c.h.b16 %v336
        %v1049 = vunpack.c.l.b16 %v337
        %v1050 = vunpack.c.h.b16 %v337
        %v1051 = vunpack.c.l.b16 %v338
        %v1052 = vunpack.c.h.b16 %v338
        %v1053 = vunpack.c.l.b16 %v339
        %v1054 = vunpack.c.h.b16 %v339
        %v1055 = vunpack.c.l.b16 %v340
        %v1056 = vunpack.c.h.b16 %v340
        %v1057 = vunpack.c.l.b16 %v341
        %v1058 = vunpack.c.h.b16 %v341
        %v1059 = vunpack.c.l.b16 %v342
        %v1060 = vunpack.c.h.b16 %v342
        %v1061 = vunpack.c.l.b16 %v343
        %v1062 = vunpack.c.h.b16 %v343
        %v1063 = vunpack.c.l.b16 %v344
        %v1064 = vunpack.c.h.b16 %v344
        %v1065 = vunpack.c.l.b16 %v345
        %v1066 = vunpack.c.h.b16 %v345
        %v1067 = vunpack.c.l.b16 %v346
        %v1068 = vunpack.c.h.b16 %v346
        %v1069 = vunpack.c.l.b16 %v347
        %v1070 = vunpack.c.h.b16 %v347
        %v1071 = vunpack.c.l.b16 %v348
        %v1072 = vunpack.c.h.b16 %v348
        %v1073 = vunpack.c.l.b16 %v349
        %v1074 = vunpack.c.h.b16 %v349
        %v1075 = vunpack.c.l.b16 %v350
        %v1076 = vunpack.c.h.b16 %v350
        %v1077 = vunpack.c.l.b16 %v351
        %v1078 = vunpack.c.h.b16 %v351
        %v1079 = vunpack.c.l.b16 %v352
        %v1080 = vunpack.c.h.b16 %v352
        %v1081 = vunpack.c.l.b16 %v353
        %v1082 = vunpack.c.h.b16 %v353
        %v1083 = vunpack.c.l.b16 %v354
        %v1084 = vunpack.c.h.b16 %v354
        %v1085 = vunpack.c.l.b16 %v355
        %v1086 = vunpack.c.h.b16 %v355
        %v1087 = vunpack.c.l.b16 %v356
        %v1088 = vunpack.c.h.b16 %v356
        %v1089 = vunpack.c.l.b16 %v357
        %v1090 = vunpack.c.h.b16 %v357
        %v1091 = vunpack.c.l.b16 %v358
        %v1092 = vunpack.c.h.b16 %v358
        %v1093 = vunpack.c.l.b16 %v359
        %v1094 = vunpack.c.h.b16 %v359
        %v1095 = vunpack.c.l.b16 %v360
        %v1096 = vunpack.c.h.b16 %v360
        %v1097 = vunpack.c.l.b16 %v361
        %v1098 = vunpack.c.h.b16 %v361
        %v1099 = vunpack.c.l.b16 %v362
        %v1100 = vunpack.c.h.b16 %v362
        %v1101 = vunpack.c.l.b16 %v363
        %v1102 = vunpack.c.h.b16 %v363
        %v1103 = vunpack.c.l.b16 %v364
        %v1104 = vunpack.c.h.b16 %v364
        %v1105 = vunpack.c.l.b16 %v365
        %v1106 = vunpack.c.h.b16 %v365
        %v1107 = vunpack.c.l.b16 %v366
        %v1108 = vunpack.c.h.b16 %v366
        %v1109 = vunpack.c.l.b16 %v367
        %v1110 = vunpack.c.h.b16 %v367
        %v1111 = vunpack.c.l.b16 %v368
        %v1112 = vunpack.c.h.b16 %v368
        %v1113 = vunpack.c.l.b16 %v369
        %v1114 = vunpack.c.h.b16 %v369
        %v1115 = vunpack.c.l.b16 %v370
        %v1116 = vunpack.c.h.b16 %v370
        %v1117 = vunpack.c.l.b16 %v371
        %v1118 = vunpack.c.h.b16 %v371
        %v1119 = vunpack.c.l.b16 %v372
        %v1120 = vunpack.c.h.b16 %v372
        %v1121 = vunpack.c.l.b16 %v373
        %v1122 = vunpack.c.h.b16 %v373
        %v1123 = vunpack.c.l.b16 %v374
        %v1124 = vunpack.c.h.b16 %v374
        %v1125 = vunpack.c.l.b16 %v375
        %v1126 = vunpack.c.h.b16 %v375
        %v1127 = vunpack.c.l.b16 %v376
        %v1128 = vunpack.c.h.b16 %v376
        %v1129 = vunpack.c.l.b16 %v377
        %v1130 = vunpack.c.h.b16 %v377
        %v1131 = vunpack.c.l.b16 %v378
        %v1132 = vunpack.c.h.b16 %v378
        %v1133 = vunpack.c.l.b16 %v379
        %v1134 = vunpack.c.h.b16 %v379
        %v1135 = vunpack.c.l.b16 %v380
        %v1136 = vunpack.c.h.b16 %v380
        %v1137 = vunpack.c.l.b16 %v381
        %v1138 = vunpack.c.h.b16 %v381
        %v1139 = vunpack.c.l.b16 %v382
        %v1140 = vunpack.c.h.b16 %v382
        %v1141 = vunpack.c.l.b16 %v383
        %v1142 = vunpack.c.h.b16 %v383
        %v1143 = vunpack.c.l.b16 %v384
        %v1144 = vunpack.c.h.b16 %v384
        %v1145 = vunpack.c.l.b16 %v385
        %v1146 = vunpack.c.h.b16 %v385
        %v1147 = vunpack.c.l.b16 %v386
        %v1148 = vunpack.c.h.b16 %v386
        %v1149 = vunpack.c.l.b16 %v387
        %v1150 = vunpack.c.h.b16 %v387
        %v1151 = vunpack.c.l.b16 %v388
        %v1152 = vunpack.c.h.b16 %v388
        %v1153 = vunpack.c.l.b16 %v389
        %v1154 = vunpack.c.h.b16 %v389
        %v1155 = vunpack.c.l.b16 %v390
        %v1156 = vunpack.c.h.b16 %v390
        %v1157 = vunpack.c.l.b16 %v391
        %v1158 = vunpack.c.h.b16 %v391
        %v1159 = vunpack.c.l.b16 %v392
        %v1160 = vunpack.c.h.b16 %v392
        %v1161 = vunpack.c.l.b16 %v393
        %v1162 = vunpack.c.h.b16 %v393
        %v1163 = vunpack.c.l.b16 %v394
        %v1164 = vunpack.c.h.b16 %v394
        %v1165 = vunpack.c.l.b16 %v395
        %v1166 = vunpack.c.h.b16 %v395
        %v1167 = vunpack.c.l.b16 %v396
        %v1168 = vunpack.c.h.b16 %v396
        %v1169 = vunpack.c.l.b16 %v397
        %v1170 = vunpack.c.h.b16 %v397
        %v1171 = vunpack.c.l.b16 %v398
        %v1172 = vunpack.c.h.b16 %v398
        %v1173 = vunpack.c.l.b16 %v399
        %v1174 = vunpack.c.h.b16 %v399
        %v1175 = vunpack.c.l.b16 %v400
        %v1176 = vunpack.c.h.b16 %v400
        %v1177 = vunpack.c.l.b16 %v401
        %v1178 = vunpack.c.h.b16 %v401
        %v1179 = vunpack.c.l.b16 %v402
        %v1180 = vunpack.c.h.b16 %v402
        %v1181 = vunpack.c.l.b16 %v403
        %v1182 = vunpack.c.h.b16 %v403
        %v1183 = vunpack.c.l.b16 %v404
        %v1184 = vunpack.c.h.b16 %v404
        %v1185 = vunpack.c.l.b16 %v405
        %v1186 = vunpack.c.h.b16 %v405
        %v1187 = vunpack.c.l.b16 %v406
        %v1188 = vunpack.c.h.b16 %v406
        %v1189 = vunpack.c.l.b16 %v407
        %v1190 = vunpack.c.h.b16 %v407
        %v1191 = vunpack.c.l.b16 %v408
        %v1192 = vunpack.c.h.b16 %v408
        %v1193 = vunpack.c.l.b16 %v409
        %v1194 = vunpack.c.h.b16 %v409
        %v1195 = vunpack.c.l.b16 %v410
        %v1196 = vunpack.c.h.b16 %v410
        %v1197 = vunpack.c.l.b16 %v411
        %v1198 = vunpack.c.h.b16 %v411
        %v1199 = vunpack.c.l.b16 %v412
        %v1200 = vunpack.c.h.b16 %v412
        %v1201 = vunpack.c.l.b16 %v413
        %v1202 = vunpack.c.h.b16 %v413
        %v1203 = vunpack.c.l.b16 %v414
        %v1204 = vunpack.c.h.b16 %v414
        %v1205 = vunpack.c.l.b16 %v415
        %v1206 = vunpack.c.h.b16 %v415
        %v1207 = vunpack.c.l.b16 %v416
        %v1208 = vunpack.c.h.b16 %v416
        %v1209 = vunpack.c.l.b16 %v417
        %v1210 = vunpack.c.h.b16 %v417
        %v1211 = vunpack.c.l.b16 %v418
        %v1212 = vunpack.c.h.b16 %v418
        %v1213 = vunpack.c.l.b16 %v419
        %v1214 = vunpack.c.h.b16 %v419
        %v1215 = vunpack.c.l.b16 %v420
        %v1216 = vunpack.c.h.b16 %v420
        %v1217 = vunpack.c.l.b16 %v421
        %v1218 = vunpack.c.h.b16 %v421
        %v1219 = vunpack.c.l.b16 %v422
        %v1220 = vunpack.c.h.b16 %v422
        %v1221 = vunpack.c.l.b16 %v423
        %v1222 = vunpack.c.h.b16 %v423
        %v1223 = vunpack.c.l.b16 %v424
        %v1224 = vunpack.c.h.b16 %v424
        %v1225 = vunpack.c.l.b16 %v425
        %v1226 = vunpack.c.h.b16 %v425
        %v1227 = vunpack.c.l.b16 %v426
        %v1228 = vunpack.c.h.b16 %v426
        %v1229 = vunpack.c.l.b16 %v427
        %v1230 = vunpack.c.h.b16 %v427
        %v1231 = vunpack.c.l.b16 %v428
        %v1232 = vunpack.c.h.b16 %v428
        %v1233 = vunpack.c.l.b16 %v429
        %v1234 = vunpack.c.h.b16 %v429
        %v1235 = vunpack.c.l.b16 %v430
        %v1236 = vunpack.c.h.b16 %v430
        %v1237 = vunpack.c.l.b16 %v431
        %v1238 = vunpack.c.h.b16 %v431
        %v1239 = vunpack.c.l.b16 %v432
        %v1240 = vunpack.c.h.b16 %v432
        %v1241 = vunpack.c.l.b16 %v433
        %v1242 = vunpack.c.h.b16 %v433
        %v1243 = vunpack.c.l.b16 %v434
        %v1244 = vunpack.c.h.b16 %v434
        %v1245 = vunpack.c.l.b16 %v435
        %v1246 = vunpack.c.h.b16 %v435
        %v1247 = vunpack.c.l.b16 %v436
        %v1248 = vunpack.c.h.b16 %v436
        %v1249 = vunpack.c.l.b16 %v437
        %v1250 = vunpack.c.h.b16 %v437
        %v1251 = vunpack.c.l.b16 %v438
        %v1252 = vunpack.c.h.b16 %v438
        %v1253 = vunpack.c.l.b16 %v439
        %v1254 = vunpack.c.h.b16 %v439
        %v1255 = vunpack.c.l.b16 %v440
        %v1256 = vunpack.c.h.b16 %v440
        %v1257 = vunpack.c.l.b16 %v441
        %v1258 = vunpack.c.h.b16 %v441
        %v1259 = vunpack.c.l.b16 %v442
        %v1260 = vunpack.c.h.b16 %v442
        %v1261 = vunpack.c.l.b16 %v443
        %v1262 = vunpack.c.h.b16 %v443
        %v1263 = vunpack.c.l.b16 %v444
        %v1264 = vunpack.c.h.b16 %v444
        %v1265 = vunpack.c.l.b16 %v445
        %v1266 = vunpack.c.h.b16 %v445
        %v1267 = vunpack.c.l.b16 %v446
        %v1268 = vunpack.c.h.b16 %v446
        %v1269 = vunpack.c.l.b16 %v447
        %v1270 = vunpack.c.h.b16 %v447
        %v1271 = vunpack.c.l.b16 %v448
        %v1272 = vunpack.c.h.b16 %v448
        %v1273 = vunpack.c.l.b16 %v449
        %v1274 = vunpack.c.h.b16 %v449
        %v1275 = vunpack.c.l.b16 %v450
        %v1276 = vunpack.c.h.b16 %v450
        %v1277 = vpack.c.b16 %v769, %v765
        %v1278 = vpack.c.b16 %v770, %v766
        %v1279 = vpack.c.b16 %v771, %v767
        %v1280 = vpack.c.b16 %v772, %v768
        %v1281 = vpack.c.b16 %v777, %v773
        %v1282 = vpack.c.b16 %v778, %v774
        %v1283 = vpack.c.b16 %v779, %v775
        %v1284 = vpack.c.b16 %v780, %v776
        %v1285 = vpack.c.b16 %v785, %v781
        %v1286 = vpack.c.b16 %v786, %v782
        %v1287 = vpack.c.b16 %v787, %v783
        %v1288 = vpack.c.b16 %v788, %v784
        %v1289 = vpack.c.b16 %v793, %v789
        %v1290 = vpack.c.b16 %v794, %v790
        %v1291 = vpack.c.b16 %v795, %v791
        %v1292 = vpack.c.b16 %v796, %v792
        %v1293 = vpack.c.b16 %v801, %v797
        %v1294 = vpack.c.b16 %v802, %v798
        %v1295 = vpack.c.b16 %v803, %v799
        %v1296 = vpack.c.b16 %v804, %v800
        %v1297 = vpack.c.b16 %v809, %v805
        %v1298 = vpack.c.b16 %v810, %v806
        %v1299 = vpack.c.b16 %v811, %v807
        %v1300 = vpack.c.b16 %v812, %v808
        %v1301 = vpack.c.b16 %v817, %v813
        %v1302 = vpack.c.b16 %v818, %v814
        %v1303 = vpack.c.b16 %v819, %v815
        %v1304 = vpack.c.b16 %v820, %v816
        %v1305 = vpack.c.b16 %v825, %v821
        %v1306 = vpack.c.b16 %v826, %v822
        %v1307 = vpack.c.b16 %v827, %v823
        %v1308 = vpack.c.b16 %v828, %v824
        %v1309 = vpack.c.b16 %v833, %v829
        %v1310 = vpack.c.b16 %v834, %v830
        %v1311 = vpack.c.b16 %v835, %v831
        %v1312 = vpack.c.b16 %v836, %v832
        %v1313 = vpack.c.b16 %v841, %v837
        %v1314 = vpack.c.b16 %v842, %v838
        %v1315 = vpack.c.b16 %v843, %v839
        %v1316 = vpack.c.b16 %v844, %v840
        %v1317 = vpack.c.b16 %v849, %v845
        %v1318 = vpack.c.b16 %v850, %v846
        %v1319 = vpack.c.b16 %v851, %v847
        %v1320 = vpack.c.b16 %v852, %v848
        %v1321 = vpack.c.b16 %v857, %v853
        %v1322 = vpack.c.b16 %v858, %v854
        %v1323 = vpack.c.b16 %v859, %v855
        %v1324 = vpack.c.b16 %v860, %v856
        %v1325 = vpack.c.b16 %v865, %v861
        %v1326 = vpack.c.b16 %v866, %v862
        %v1327 = vpack.c.b16 %v867, %v863
        %v1328 = vpack.c.b16 %v868, %v864
        %v1329 = vpack.c.b16 %v873, %v869
        %v1330 = vpack.c.b16 %v874, %v870
        %v1331 = vpack.c.b16 %v875, %v871
        %v1332 = vpack.c.b16 %v876, %v872
        %v1333 = vpack.c.b16 %v881, %v877
        %v1334 = vpack.c.b16 %v882, %v878
        %v1335 = vpack.c.b16 %v883, %v879
        %v1336 = vpack.c.b16 %v884, %v880
        %v1337 = vpack.c.b16 %v889, %v885
        %v1338 = vpack.c.b16 %v890, %v886
        %v1339 = vpack.c.b16 %v891, %v887
        %v1340 = vpack.c.b16 %v892, %v888
        %v1341 = vpack.c.b16 %v897, %v893
        %v1342 = vpack.c.b16 %v898, %v894
        %v1343 = vpack.c.b16 %v899, %v895
        %v1344 = vpack.c.b16 %v900, %v896
        %v1345 = vpack.c.b16 %v905, %v901
        %v1346 = vpack.c.b16 %v906, %v902
        %v1347 = vpack.c.b16 %v907, %v903
        %v1348 = vpack.c.b16 %v908, %v904
        %v1349 = vpack.c.b16 %v913, %v909
        %v1350 = vpack.c.b16 %v914, %v910
        %v1351 = vpack.c.b16 %v915, %v911
        %v1352 = vpack.c.b16 %v916, %v912
        %v1353 = vpack.c.b16 %v921, %v917
        %v1354 = vpack.c.b16 %v922, %v918
        %v1355 = vpack.c.b16 %v923, %v919
        %v1356 = vpack.c.b16 %v924, %v920
        %v1357 = vpack.c.b16 %v929, %v925
        %v1358 = vpack.c.b16 %v930, %v926
        %v1359 = vpack.c.b16 %v931, %v927
        %v1360 = vpack.c.b16 %v932, %v928
        %v1361 = vpack.c.b16 %v937, %v933
        %v1362 = vpack.c.b16 %v938, %v934
        %v1363 = vpack.c.b16 %v939, %v935
        %v1364 = vpack.c.b16 %v940, %v936
        %v1365 = vpack.c.b16 %v945, %v941
        %v1366 = vpack.c.b16 %v946, %v942
        %v1367 = vpack.c.b16 %v947, %v943
        %v1368 = vpack.c.b16 %v948, %v944
        %v1369 = vpack.c.b16 %v953, %v949
        %v1370 = vpack.c.b16 %v954, %v950
        %v1371 = vpack.c.b16 %v955, %v951
        %v1372 = vpack.c.b16 %v956, %v952
        %v1373 = vpack.c.b16 %v961, %v957
        %v1374 = vpack.c.b16 %v962, %v958
        %v1375 = vpack.c.b16 %v963, %v959
        %v1376 = vpack.c.b16 %v964, %v960
        %v1377 = vpack.c.b16 %v969, %v965
        %v1378 = vpack.c.b16 %v970, %v966
        %v1379 = vpack.c.b16 %v971, %v967
        %v1380 = vpack.c.b16 %v972, %v968
        %v1381 = vpack.c.b16 %v977, %v973
        %v1382 = vpack.c.b16 %v978, %v974
        %v1383 = vpack.c.b16 %v979, %v975
        %v1384 = vpack.c.b16 %v980, %v976
        %v1385 = vpack.c.b16 %v985, %v981
        %v1386 = vpack.c.b16 %v986, %v982
        %v1387 = vpack.c.b16 %v987, %v983
        %v1388 = vpack.c.b16 %v988, %v984
        %v1389 = vpack.c.b16 %v993, %v989
        %v1390 = vpack.c.b16 %v994, %v990
        %v1391 = vpack.c.b16 %v995, %v991
        %v1392 = vpack.c.b16 %v996, %v992
        %v1393 = vpack.c.b16 %v1001, %v997
        %v1394 = vpack.c.b16 %v1002, %v998
        %v1395 = vpack.c.b16 %v1003, %v999
        %v1396 = vpack.c.b16 %v1004, %v1000
        %v1397 = vpack.c.b16 %v1009, %v1005
        %v1398 = vpack.c.b16 %v1010, %v1006
        %v1399 = vpack.c.b16 %v1011, %v1007
        %v1400 = vpack.c.b16 %v1012, %v1008
        %v1401 = vpack.c.b16 %v1017, %v1013
        %v1402 = vpack.c.b16 %v1018, %v1014
        %v1403 = vpack.c.b16 %v1019, %v1015
        %v1404 = vpack.c.b16 %v1020, %v1016
        %v1405 = vpack.c.b16 %v1025, %v1021
        %v1406 = vpack.c.b16 %v1026, %v1022
        %v1407 = vpack.c.b16 %v1027, %v1023
        %v1408 = vpack.c.b16 %v1028, %v1024
        %v1409 = vpack.c.b16 %v1033, %v1029
        %v1410 = vpack.c.b16 %v1034, %v1030
        %v1411 = vpack.c.b16 %v1035, %v1031
        %v1412 = vpack.c.b16 %v1036, %v1032
        %v1413 = vpack.c.b16 %v1041, %v1037
        %v1414 = vpack.c.b16 %v1042, %v1038
        %v1415 = vpack.c.b16 %v1043, %v1039
        %v1416 = vpack.c.b16 %v1044, %v1040
        %v1417 = vpack.c.b16 %v1049, %v1045
        %v1418 = vpack.c.b16 %v1050, %v1046
        %v1419 = vpack.c.b16 %v1051, %v1047
        %v1420 = vpack.c.b16 %v1052, %v1048
        %v1421 = vpack.c.b16 %v1057, %v1053
        %v1422 = vpack.c.b16 %v1058, %v1054
        %v1423 = vpack.c.b16 %v1059, %v1055
        %v1424 = vpack.c.b16 %v1060, %v1056
        %v1425 = vpack.c.b16 %v1065, %v1061
        %v1426 = vpack.c.b16 %v1066, %v1062
        %v1427 = vpack.c.b16 %v1067, %v1063
        %v1428 = vpack.c.b16 %v1068, %v1064
        %v1429 = vpack.c.b16 %v1073, %v1069
        %v1430 = vpack.c.b16 %v1074, %v1070
        %v1431 = vpack.c.b16 %v1075, %v1071
        %v1432 = vpack.c.b16 %v1076, %v1072
        %v1433 = vpack.c.b16 %v1081, %v1077
        %v1434 = vpack.c.b16 %v1082, %v1078
        %v1435 = vpack.c.b16 %v1083, %v1079
        %v1436 = vpack.c.b16 %v1084, %v1080
        %v1437 = vpack.c.b16 %v1089, %v1085
        %v1438 = vpack.c.b16 %v1090, %v1086
        %v1439 = vpack.c.b16 %v1091, %v1087
        %v1440 = vpack.c.b16 %v1092, %v1088
        %v1441 = vpack.c.b16 %v1097, %v1093
        %v1442 = vpack.c.b16 %v1098, %v1094
        %v1443 = vpack.c.b16 %v1099, %v1095
        %v1444 = vpack.c.b16 %v1100, %v1096
        %v1445 = vpack.c.b16 %v1105, %v1101
        %v1446 = vpack.c.b16 %v1106, %v1102
        %v1447 = vpack.c.b16 %v1107, %v1103
        %v1448 = vpack.c.b16 %v1108, %v1104
        %v1449 = vpack.c.b16 %v1113, %v1109
        %v1450 = vpack.c.b16 %v1114, %v1110
        %v1451 = vpack.c.b16 %v1115, %v1111
        %v1452 = vpack.c.b16 %v1116, %v1112
        %v1453 = vpack.c.b16 %v1121, %v1117
        %v1454 = vpack.c.b16 %v1122, %v1118
        %v1455 = vpack.c.b16 %v1123, %v1119
        %v1456 = vpack.c.b16 %v1124, %v1120
        %v1457 = vpack.c.b16 %v1129, %v1125
        %v1458 = vpack.c.b16 %v1130, %v1126
        %v1459 = vpack.c.b16 %v1131, %v1127
        %v1460 = vpack.c.b16 %v1132, %v1128
        %v1461 = vpack.c.b16 %v1137, %v1133
        %v1462 = vpack.c.b16 %v1138, %v1134
        %v1463 = vpack.c.b16 %v1139, %v1135
        %v1464 = vpack.c.b16 %v1140, %v1136
        %v1465 = vpack.c.b16 %v1145, %v1141
        %v1466 = vpack.c.b16 %v1146, %v1142
        %v1467 = vpack.c.b16 %v1147, %v1143
        %v1468 = vpack.c.b16 %v1148, %v1144
        %v1469 = vpack.c.b16 %v1153, %v1149
        %v1470 = vpack.c.b16 %v1154, %v1150
        %v1471 = vpack.c.b16 %v1155, %v1151
        %v1472 = vpack.c.b16 %v1156, %v1152
        %v1473 = vpack.c.b16 %v1161, %v1157
        %v1474 = vpack.c.b16 %v1162, %v1158
        %v1475 = vpack.c.b16 %v1163, %v1159
        %v1476 = vpack.c.b16 %v1164, %v1160
        %v1477 = vpack.c.b16 %v1169, %v1165
        %v1478 = vpack.c.b16 %v1170, %v1166
        %v1479 = vpack.c.b16 %v1171, %v1167
        %v1480 = vpack.c.b16 %v1172, %v1168
        %v1481 = vpack.c.b16 %v1177, %v1173
        %v1482 = vpack.c.b16 %v1178, %v1174
        %v1483 = vpack.c.b16 %v1179, %v1175
        %v1484 = vpack.c.b16 %v1180, %v1176
        %v1485 = vpack.c.b16 %v1185, %v1181
        %v1486 = vpack.c.b16 %v1186, %v1182
        %v1487 = vpack.c.b16 %v1187, %v1183
        %v1488 = vpack.c.b16 %v1188, %v1184
        %v1489 = vpack.c.b16 %v1193, %v1189
        %v1490 = vpack.c.b16 %v1194, %v1190
        %v1491 = vpack.c.b16 %v1195, %v1191
        %v1492 = vpack.c.b16 %v1196, %v1192
        %v1493 = vpack.c.b16 %v1201, %v1197
        %v1494 = vpack.c.b16 %v1202, %v1198
        %v1495 = vpack.c.b16 %v1203, %v1199
        %v1496 = vpack.c.b16 %v1204, %v1200
        %v1497 = vpack.c.b16 %v1209, %v1205
        %v1498 = vpack.c.b16 %v1210, %v1206
        %v1499 = vpack.c.b16 %v1211, %v1207
        %v1500 = vpack.c.b16 %v1212, %v1208
        %v1501 = vpack.c.b16 %v1217, %v1213
        %v1502 = vpack.c.b16 %v1218, %v1214
        %v1503 = vpack.c.b16 %v1219, %v1215
        %v1504 = vpack.c.b16 %v1220, %v1216
        %v1505 = vpack.c.b16 %v1225, %v1221
        %v1506 = vpack.c.b16 %v1226, %v1222
        %v1507 = vpack.c.b16 %v1227, %v1223
        %v1508 = vpack.c.b16 %v1228, %v1224
        %v1509 = vpack.c.b16 %v1233, %v1229
        %v1510 = vpack.c.b16 %v1234, %v1230
        %v1511 = vpack.c.b16 %v1235, %v1231
        %v1512 = vpack.c.b16 %v1236, %v1232
        %v1513 = vpack.c.b16 %v1241, %v1237
        %v1514 = vpack.c.b16 %v1242, %v1238
        %v1515 = vpack.c.b16 %v1243, %v1239
        %v1516 = vpack.c.b16 %v1244, %v1240
        %v1517 = vpack.c.b16 %v1249, %v1245
        %v1518 = vpack.c.b16 %v1250, %v1246
        %v1519 = vpack.c.b16 %v1251, %v1247
        %v1520 = vpack.c.b16 %v1252, %v1248
        %v1521 = vpack.c.b16 %v1257, %v1253
        %v1522 = vpack.c.b16 %v1258, %v1254
        %v1523 = vpack.c.b16 %v1259, %v1255
        %v1524 = vpack.c.b16 %v1260, %v1256
        %v1525 = vpack.c.b16 %v1265, %v1261
        %v1526 = vpack.c.b16 %v1266, %v1262
        %v1527 = vpack.c.b16 %v1267, %v1263
        %v1528 = vpack.c.b16 %v1268, %v1264
        %v1529 = vpack.c.b16 %v1273, %v1269
        %v1530 = vpack.c.b16 %v1274, %v1270
        %v1531 = vpack.c.b16 %v1275, %v1271
        %v1532 = vpack.c.b16 %v1276, %v1272
        %1789 = vmatprep.subr.bf16.mxu0 %v1306
        %1790 = vmatpush1.bf16.msra.mxu0 %v1305
        %1791 = vmatprep.subr.bf16.mxu0 %v1302
        %1792 = vmatpush1.bf16.msra.mxu0 %v1301
        %1793 = vmatprep.subr.bf16.mxu0 %v1298
        %1794 = vmatpush1.bf16.msra.mxu0 %v1297
        %1795 = vmatprep.subr.bf16.mxu0 %v1294
        %1796 = vmatpush1.bf16.msra.mxu0 %v1293
        %1797 = vmatprep.subr.bf16.mxu0 %v1290
        %1798 = vmatpush1.bf16.msra.mxu0 %v1289
        %1799 = vmatprep.subr.bf16.mxu0 %v1286
        %1800 = vmatpush1.bf16.msra.mxu0 %v1285
        %1801 = vmatprep.subr.bf16.mxu0 %v1282
        %1802 = vmatpush1.bf16.msra.mxu0 %v1281
        %1803 = vmatprep.subr.bf16.mxu0 %v1278
        %1804 = vmatpush1.bf16.msra.mxu0 %v1277
        %1805 = vmatprep.subr.bf16.mxu0 %v1338
        %1806 = vmatpush2.bf16.msra.mxu0 %v1337
        %1807 = vmatprep.subr.bf16.mxu0 %v1334
        %1808 = vmatpush2.bf16.msra.mxu0 %v1333
        %1809 = vmatprep.subr.bf16.mxu0 %v1330
        %1810 = vmatpush2.bf16.msra.mxu0 %v1329
        %1811 = vmatprep.subr.bf16.mxu0 %v1326
        %1812 = vmatpush2.bf16.msra.mxu0 %v1325
        %1813 = vmatprep.subr.bf16.mxu0 %v1322
        %1814 = vmatpush2.bf16.msra.mxu0 %v1321
        %1815 = vmatprep.subr.bf16.mxu0 %v1318
        %1816 = vmatpush2.bf16.msra.mxu0 %v1317
        %1817 = vmatprep.subr.bf16.mxu0 %v1314
        %1818 = vmatpush2.bf16.msra.mxu0 %v1313
        %1819 = vmatprep.subr.bf16.mxu0 %v1310
        %1820 = vmatpush2.bf16.msra.mxu0 %v1309
        %1821 = vmatprep.mubr.bf16.mxu0 %v489
        %1822 = vmatmul.mubr.bf16.gmra.mxu0 %v475
        %v1823 = vpop.f32.mrf.mxu0
        %v1824 = vadd.f32 0.0, %v1823
        %v1825 = vpop.f32.mrf.mxu0
        %v1826 = vadd.f32 0.0, %v1825
        %v1827 = vpop.f32.mrf.mxu0
        %v1828 = vpop.f32.mrf.mxu0
        %1829 = vdwg.mxu0
        %1830 = vmatprep.subr.bf16.mxu0 %v1370
        %1831 = vmatpush1.bf16.msra.mxu0 %v1369
        %1832 = vmatprep.subr.bf16.mxu0 %v1366
        %1833 = vmatpush1.bf16.msra.mxu0 %v1365
        %1834 = vmatprep.subr.bf16.mxu0 %v1362
        %1835 = vmatpush1.bf16.msra.mxu0 %v1361
        %1836 = vmatprep.subr.bf16.mxu0 %v1358
        %1837 = vmatpush1.bf16.msra.mxu0 %v1357
        %1838 = vmatprep.subr.bf16.mxu0 %v1354
        %1839 = vmatpush1.bf16.msra.mxu0 %v1353
        %1840 = vmatprep.subr.bf16.mxu0 %v1350
        %1841 = vmatpush1.bf16.msra.mxu0 %v1349
        %1842 = vmatprep.subr.bf16.mxu0 %v1346
        %1843 = vmatpush1.bf16.msra.mxu0 %v1345
        %1844 = vmatprep.subr.bf16.mxu0 %v1342
        %1845 = vmatpush1.bf16.msra.mxu0 %v1341
        %1846 = vmatprep.subr.bf16.mxu0 %v1402
        %1847 = vmatpush2.bf16.msra.mxu0 %v1401
        %1848 = vmatprep.subr.bf16.mxu0 %v1398
        %1849 = vmatpush2.bf16.msra.mxu0 %v1397
        %1850 = vmatprep.subr.bf16.mxu0 %v1394
        %1851 = vmatpush2.bf16.msra.mxu0 %v1393
        %1852 = vmatprep.subr.bf16.mxu0 %v1390
        %1853 = vmatpush2.bf16.msra.mxu0 %v1389
        %1854 = vmatprep.subr.bf16.mxu0 %v1386
        %1855 = vmatpush2.bf16.msra.mxu0 %v1385
        %1856 = vmatprep.subr.bf16.mxu0 %v1382
        %1857 = vmatpush2.bf16.msra.mxu0 %v1381
        %1858 = vmatprep.subr.bf16.mxu0 %v1378
        %1859 = vmatpush2.bf16.msra.mxu0 %v1377
        %1860 = vmatprep.subr.bf16.mxu0 %v1374
        %1861 = vmatpush2.bf16.msra.mxu0 %v1373
        %1862 = vmatprep.mubr.bf16.mxu0 %v499
        %1863 = vmatmul.mubr.bf16.gmra.mxu0 %v497
        %v1864 = vpop.f32.mrf.mxu0
        %v1865 = vadd.f32 %v1824, %v1864
        %v1866 = vpop.f32.mrf.mxu0
        %v1867 = vadd.f32 %v1826, %v1866
        %v1868 = vpop.f32.mrf.mxu0
        %v1869 = vpop.f32.mrf.mxu0
        %1870 = vdwg.mxu0
        %1871 = vmatprep.subr.bf16.mxu0 %v1434
        %1872 = vmatpush1.bf16.msra.mxu0 %v1433
        %1873 = vmatprep.subr.bf16.mxu0 %v1430
        %1874 = vmatpush1.bf16.msra.mxu0 %v1429
        %1875 = vmatprep.subr.bf16.mxu0 %v1426
        %1876 = vmatpush1.bf16.msra.mxu0 %v1425
        %1877 = vmatprep.subr.bf16.mxu0 %v1422
        %1878 = vmatpush1.bf16.msra.mxu0 %v1421
        %1879 = vmatprep.subr.bf16.mxu0 %v1418
        %1880 = vmatpush1.bf16.msra.mxu0 %v1417
        %1881 = vmatprep.subr.bf16.mxu0 %v1414
        %1882 = vmatpush1.bf16.msra.mxu0 %v1413
        %1883 = vmatprep.subr.bf16.mxu0 %v1410
        %1884 = vmatpush1.bf16.msra.mxu0 %v1409
        %1885 = vmatprep.subr.bf16.mxu0 %v1406
        %1886 = vmatpush1.bf16.msra.mxu0 %v1405
        %1887 = vmatprep.subr.bf16.mxu0 %v1466
        %1888 = vmatpush2.bf16.msra.mxu0 %v1465
        %1889 = vmatprep.subr.bf16.mxu0 %v1462
        %1890 = vmatpush2.bf16.msra.mxu0 %v1461
        %1891 = vmatprep.subr.bf16.mxu0 %v1458
        %1892 = vmatpush2.bf16.msra.mxu0 %v1457
        %1893 = vmatprep.subr.bf16.mxu0 %v1454
        %1894 = vmatpush2.bf16.msra.mxu0 %v1453
        %1895 = vmatprep.subr.bf16.mxu0 %v1450
        %1896 = vmatpush2.bf16.msra.mxu0 %v1449
        %1897 = vmatprep.subr.bf16.mxu0 %v1446
        %1898 = vmatpush2.bf16.msra.mxu0 %v1445
        %1899 = vmatprep.subr.bf16.mxu0 %v1442
        %1900 = vmatpush2.bf16.msra.mxu0 %v1441
        %1901 = vmatprep.subr.bf16.mxu0 %v1438
        %1902 = vmatpush2.bf16.msra.mxu0 %v1437
        %1903 = vmatprep.mubr.bf16.mxu0 %v496
        %1904 = vmatmul.mubr.bf16.gmra.mxu0 %v482
        %v1905 = vpop.f32.mrf.mxu0
        %v1906 = vadd.f32 %v1865, %v1905
        %v1907 = vpop.f32.mrf.mxu0
        %v1908 = vadd.f32 %v1867, %v1907
        %v1909 = vpop.f32.mrf.mxu0
        %v1910 = vpop.f32.mrf.mxu0
        %1911 = vdwg.mxu0
        %1912 = vmatprep.subr.bf16.mxu0 %v1498
        %1913 = vmatpush1.bf16.msra.mxu0 %v1497
        %1914 = vmatprep.subr.bf16.mxu0 %v1494
        %1915 = vmatpush1.bf16.msra.mxu0 %v1493
        %1916 = vmatprep.subr.bf16.mxu0 %v1490
        %1917 = vmatpush1.bf16.msra.mxu0 %v1489
        %1918 = vmatprep.subr.bf16.mxu0 %v1486
        %1919 = vmatpush1.bf16.msra.mxu0 %v1485
        %1920 = vmatprep.subr.bf16.mxu0 %v1482
        %1921 = vmatpush1.bf16.msra.mxu0 %v1481
        %1922 = vmatprep.subr.bf16.mxu0 %v1478
        %1923 = vmatpush1.bf16.msra.mxu0 %v1477
        %1924 = vmatprep.subr.bf16.mxu0 %v1474
        %1925 = vmatpush1.bf16.msra.mxu0 %v1473
        %1926 = vmatprep.subr.bf16.mxu0 %v1470
        %1927 = vmatpush1.bf16.msra.mxu0 %v1469
        %1928 = vmatprep.subr.bf16.mxu0 %v1530
        %1929 = vmatpush2.bf16.msra.mxu0 %v1529
        %1930 = vmatprep.subr.bf16.mxu0 %v1526
        %1931 = vmatpush2.bf16.msra.mxu0 %v1525
        %1932 = vmatprep.subr.bf16.mxu0 %v1522
        %1933 = vmatpush2.bf16.msra.mxu0 %v1521
        %1934 = vmatprep.subr.bf16.mxu0 %v1518
        %1935 = vmatpush2.bf16.msra.mxu0 %v1517
        %1936 = vmatprep.subr.bf16.mxu0 %v1514
        %1937 = vmatpush2.bf16.msra.mxu0 %v1513
        %1938 = vmatprep.subr.bf16.mxu0 %v1510
        %1939 = vmatpush2.bf16.msra.mxu0 %v1509
        %1940 = vmatprep.subr.bf16.mxu0 %v1506
        %1941 = vmatpush2.bf16.msra.mxu0 %v1505
        %1942 = vmatprep.subr.bf16.mxu0 %v1502
        %1943 = vmatpush2.bf16.msra.mxu0 %v1501
        %1944 = vmatprep.mubr.bf16.mxu0 %v500
        %1945 = vmatmul.mubr.bf16.gmra.mxu0 %v498
        %v1946 = vpop.f32.mrf.mxu0
        %v1947 = vadd.f32 %v1906, %v1946
        %v1948 = vpop.f32.mrf.mxu0
        %v1949 = vadd.f32 %v1908, %v1948
        %v1950 = vpop.f32.mrf.mxu0
        %v1951 = vpop.f32.mrf.mxu0
        %1952 = vdwg.mxu0
        %1953 = vmatprep.subr.bf16.mxu0 %v1308
        %1954 = vmatpush1.bf16.msra.mxu0 %v1307
        %1955 = vmatprep.subr.bf16.mxu0 %v1304
        %1956 = vmatpush1.bf16.msra.mxu0 %v1303
        %1957 = vmatprep.subr.bf16.mxu0 %v1300
        %1958 = vmatpush1.bf16.msra.mxu0 %v1299
        %1959 = vmatprep.subr.bf16.mxu0 %v1296
        %1960 = vmatpush1.bf16.msra.mxu0 %v1295
        %1961 = vmatprep.subr.bf16.mxu0 %v1292
        %1962 = vmatpush1.bf16.msra.mxu0 %v1291
        %1963 = vmatprep.subr.bf16.mxu0 %v1288
        %1964 = vmatpush1.bf16.msra.mxu0 %v1287
        %1965 = vmatprep.subr.bf16.mxu0 %v1284
        %1966 = vmatpush1.bf16.msra.mxu0 %v1283
        %1967 = vmatprep.subr.bf16.mxu0 %v1280
        %1968 = vmatpush1.bf16.msra.mxu0 %v1279
        %1969 = vmatprep.subr.bf16.mxu0 %v1340
        %1970 = vmatpush2.bf16.msra.mxu0 %v1339
        %1971 = vmatprep.subr.bf16.mxu0 %v1336
        %1972 = vmatpush2.bf16.msra.mxu0 %v1335
        %1973 = vmatprep.subr.bf16.mxu0 %v1332
        %1974 = vmatpush2.bf16.msra.mxu0 %v1331
        %1975 = vmatprep.subr.bf16.mxu0 %v1328
        %1976 = vmatpush2.bf16.msra.mxu0 %v1327
        %1977 = vmatprep.subr.bf16.mxu0 %v1324
        %1978 = vmatpush2.bf16.msra.mxu0 %v1323
        %1979 = vmatprep.subr.bf16.mxu0 %v1320
        %1980 = vmatpush2.bf16.msra.mxu0 %v1319
        %1981 = vmatprep.subr.bf16.mxu0 %v1316
        %1982 = vmatpush2.bf16.msra.mxu0 %v1315
        %1983 = vmatprep.subr.bf16.mxu0 %v1312
        %1984 = vmatpush2.bf16.msra.mxu0 %v1311
        %1985 = vmatprep.mubr.bf16.mxu0 %v489
        %1986 = vmatmul.mubr.bf16.gmra.mxu0 %v475
        %v1987 = vpop.f32.mrf.mxu0
        %v1988 = vadd.f32 0.0, %v1987
        %v1989 = vpop.f32.mrf.mxu0
        %v1990 = vadd.f32 0.0, %v1989
        %v1991 = vpop.f32.mrf.mxu0
        %v1992 = vpop.f32.mrf.mxu0
        %1993 = vdwg.mxu0
        %1994 = vmatprep.subr.bf16.mxu0 %v1372
        %1995 = vmatpush1.bf16.msra.mxu0 %v1371
        %1996 = vmatprep.subr.bf16.mxu0 %v1368
        %1997 = vmatpush1.bf16.msra.mxu0 %v1367
        %1998 = vmatprep.subr.bf16.mxu0 %v1364
        %1999 = vmatpush1.bf16.msra.mxu0 %v1363
        %2000 = vmatprep.subr.bf16.mxu0 %v1360
        %2001 = vmatpush1.bf16.msra.mxu0 %v1359
        %2002 = vmatprep.subr.bf16.mxu0 %v1356
        %2003 = vmatpush1.bf16.msra.mxu0 %v1355
        %2004 = vmatprep.subr.bf16.mxu0 %v1352
        %2005 = vmatpush1.bf16.msra.mxu0 %v1351
        %2006 = vmatprep.subr.bf16.mxu0 %v1348
        %2007 = vmatpush1.bf16.msra.mxu0 %v1347
        %2008 = vmatprep.subr.bf16.mxu0 %v1344
        %2009 = vmatpush1.bf16.msra.mxu0 %v1343
        %2010 = vmatprep.subr.bf16.mxu0 %v1404
        %2011 = vmatpush2.bf16.msra.mxu0 %v1403
        %2012 = vmatprep.subr.bf16.mxu0 %v1400
        %2013 = vmatpush2.bf16.msra.mxu0 %v1399
        %2014 = vmatprep.subr.bf16.mxu0 %v1396
        %2015 = vmatpush2.bf16.msra.mxu0 %v1395
        %2016 = vmatprep.subr.bf16.mxu0 %v1392
        %2017 = vmatpush2.bf16.msra.mxu0 %v1391
        %2018 = vmatprep.subr.bf16.mxu0 %v1388
        %2019 = vmatpush2.bf16.msra.mxu0 %v1387
        %2020 = vmatprep.subr.bf16.mxu0 %v1384
        %2021 = vmatpush2.bf16.msra.mxu0 %v1383
        %2022 = vmatprep.subr.bf16.mxu0 %v1380
        %2023 = vmatpush2.bf16.msra.mxu0 %v1379
        %2024 = vmatprep.subr.bf16.mxu0 %v1376
        %2025 = vmatpush2.bf16.msra.mxu0 %v1375
        %2026 = vmatprep.mubr.bf16.mxu0 %v499
        %2027 = vmatmul.mubr.bf16.gmra.mxu0 %v497
        %v2028 = vpop.f32.mrf.mxu0
        %v2029 = vadd.f32 %v1988, %v2028
        %v2030 = vpop.f32.mrf.mxu0
        %v2031 = vadd.f32 %v1990, %v2030
        %v2032 = vpop.f32.mrf.mxu0
        %v2033 = vpop.f32.mrf.mxu0
        %2034 = vdwg.mxu0
        %2035 = vmatprep.subr.bf16.mxu0 %v1436
        %2036 = vmatpush1.bf16.msra.mxu0 %v1435
        %2037 = vmatprep.subr.bf16.mxu0 %v1432
        %2038 = vmatpush1.bf16.msra.mxu0 %v1431
        %2039 = vmatprep.subr.bf16.mxu0 %v1428
        %2040 = vmatpush1.bf16.msra.mxu0 %v1427
        %2041 = vmatprep.subr.bf16.mxu0 %v1424
        %2042 = vmatpush1.bf16.msra.mxu0 %v1423
        %2043 = vmatprep.subr.bf16.mxu0 %v1420
        %2044 = vmatpush1.bf16.msra.mxu0 %v1419
        %2045 = vmatprep.subr.bf16.mxu0 %v1416
        %2046 = vmatpush1.bf16.msra.mxu0 %v1415
        %2047 = vmatprep.subr.bf16.mxu0 %v1412
        %2048 = vmatpush1.bf16.msra.mxu0 %v1411
        %2049 = vmatprep.subr.bf16.mxu0 %v1408
        %2050 = vmatpush1.bf16.msra.mxu0 %v1407
        %2051 = vmatprep.subr.bf16.mxu0 %v1468
        %2052 = vmatpush2.bf16.msra.mxu0 %v1467
        %2053 = vmatprep.subr.bf16.mxu0 %v1464
        %2054 = vmatpush2.bf16.msra.mxu0 %v1463
        %2055 = vmatprep.subr.bf16.mxu0 %v1460
        %2056 = vmatpush2.bf16.msra.mxu0 %v1459
        %2057 = vmatprep.subr.bf16.mxu0 %v1456
        %2058 = vmatpush2.bf16.msra.mxu0 %v1455
        %2059 = vmatprep.subr.bf16.mxu0 %v1452
        %2060 = vmatpush2.bf16.msra.mxu0 %v1451
        %2061 = vmatprep.subr.bf16.mxu0 %v1448
        %2062 = vmatpush2.bf16.msra.mxu0 %v1447
        %2063 = vmatprep.subr.bf16.mxu0 %v1444
        %2064 = vmatpush2.bf16.msra.mxu0 %v1443
        %2065 = vmatprep.subr.bf16.mxu0 %v1440
        %2066 = vmatpush2.bf16.msra.mxu0 %v1439
        %2067 = vmatprep.mubr.bf16.mxu0 %v496
        %2068 = vmatmul.mubr.bf16.gmra.mxu0 %v482
        %v2069 = vpop.f32.mrf.mxu0
        %v2070 = vadd.f32 %v2029, %v2069
        %v2071 = vpop.f32.mrf.mxu0
        %v2072 = vadd.f32 %v2031, %v2071
        %v2073 = vpop.f32.mrf.mxu0
        %v2074 = vpop.f32.mrf.mxu0
        %2075 = vdwg.mxu0
        %2076 = vmatprep.subr.bf16.mxu0 %v1500
        %2077 = vmatpush1.bf16.msra.mxu0 %v1499
        %2078 = vmatprep.subr.bf16.mxu0 %v1496
        %2079 = vmatpush1.bf16.msra.mxu0 %v1495
        %2080 = vmatprep.subr.bf16.mxu0 %v1492
        %2081 = vmatpush1.bf16.msra.mxu0 %v1491
        %2082 = vmatprep.subr.bf16.mxu0 %v1488
        %2083 = vmatpush1.bf16.msra.mxu0 %v1487
        %2084 = vmatprep.subr.bf16.mxu0 %v1484
        %2085 = vmatpush1.bf16.msra.mxu0 %v1483
        %2086 = vmatprep.subr.bf16.mxu0 %v1480
        %2087 = vmatpush1.bf16.msra.mxu0 %v1479
        %2088 = vmatprep.subr.bf16.mxu0 %v1476
        %2089 = vmatpush1.bf16.msra.mxu0 %v1475
        %2090 = vmatprep.subr.bf16.mxu0 %v1472
        %2091 = vmatpush1.bf16.msra.mxu0 %v1471
        %2092 = vmatprep.subr.bf16.mxu0 %v1532
        %2093 = vmatpush2.bf16.msra.mxu0 %v1531
        %2094 = vmatprep.subr.bf16.mxu0 %v1528
        %2095 = vmatpush2.bf16.msra.mxu0 %v1527
        %2096 = vmatprep.subr.bf16.mxu0 %v1524
        %2097 = vmatpush2.bf16.msra.mxu0 %v1523
        %2098 = vmatprep.subr.bf16.mxu0 %v1520
        %2099 = vmatpush2.bf16.msra.mxu0 %v1519
        %2100 = vmatprep.subr.bf16.mxu0 %v1516
        %2101 = vmatpush2.bf16.msra.mxu0 %v1515
        %2102 = vmatprep.subr.bf16.mxu0 %v1512
        %2103 = vmatpush2.bf16.msra.mxu0 %v1511
        %2104 = vmatprep.subr.bf16.mxu0 %v1508
        %2105 = vmatpush2.bf16.msra.mxu0 %v1507
        %2106 = vmatprep.subr.bf16.mxu0 %v1504
        %2107 = vmatpush2.bf16.msra.mxu0 %v1503
        %2108 = vmatprep.mubr.bf16.mxu0 %v500
        %2109 = vmatmul.mubr.bf16.gmra.mxu0 %v498
        %v2110 = vpop.f32.mrf.mxu0
        %v2111 = vadd.f32 %v2070, %v2110
        %v2112 = vpop.f32.mrf.mxu0
        %v2113 = vadd.f32 %v2072, %v2112
        %v2114 = vpop.f32.mrf.mxu0
        %v2115 = vpop.f32.mrf.mxu0
        %2116 = vdwg.mxu0
        %v2121 = vcombine.low %v1947, %v1949
        %v2122 = vcombine.low %v2111, %v2113
        %v2124 = vunpack.c.l.s4 1983009808
        %v2125 = vunpack.c.0.s8 %v2124
        %v2126 = vlaneseq
        %v2127 = vshrl.u32 %v2126, 7
        %v2128 = vsub.s32 %v2125, %v2127
        %v2129 = vrot.slane %v2121, %v2128
        %v2131 = vunpack.c.l.s4 1983009808
        %v2132 = vunpack.c.0.s8 %v2131
        %v2133 = vlaneseq
        %v2134 = vshrl.u32 %v2133, 7
        %v2135 = vsub.s32 %v2132, %v2134
        %v2136 = vrot.slane %v2122, %v2135
        %v2137 = vcombine.low %v2129, %v2136
        %v2139 = vadd.f32 %v190, %v2137
        %2140 = vst [vmem:[%s182] sm:$0xff] %v2139
        %s2141 = smul.u32 4, %s20
        %p2142 = scmp.lt.s32.totalorder %s2141, 7
        %s2143 = scalar_select %p2142, %s2141, 7
        %s2144 = smul.addr %s2143, 2
        %s2145 = scalar_lea.vmem %s2, %s2144
        // Predicated region
        $region37: #{_zca_forward_impl.1} parent=27 // pred_check
          %p2146 = pneg %p95
        $region38: #{_zca_forward_impl.1} parent=27 // pred_check_branch
          %2148 = sbr.rel (%p2146) target = $region40
        $region39: #{_zca_forward_impl.1} parent=27 // pred_region
          %s2149 = smul.u32 4, %s20
        $region40: #{_zca_forward_impl.1} parent=27 // pred_fallthru
          _
      $region28: #{_zca_forward_impl.1} parent=5 // pred_fallthru
        _
      %p2150 = scmp.le.s32.totalorder 2, %s11
      // Predicated region
      $region41: #{_zca_forward_impl.1} parent=5 // pred_check
        %p2151 = pneg %p2150
      $region42: #{_zca_forward_impl.1} parent=5 // pred_check_branch
        %2153 = sbr.rel (%p2151) target = $region44
      $region43: #{_zca_forward_impl.1} parent=5 // pred_region
        %s2154 = ssub.s32 %s11, 2
        // Predicated region
        $region45: #{_zca_forward_impl.1} parent=43 // pred_check
          %p2155 = pneg %p101
        $region46: #{_zca_forward_impl.1} parent=43 // pred_check_branch
          %2157 = sbr.rel (%p2155) target = $region48
        $region47: #{_zca_forward_impl.1} parent=43 // pred_region
          %s2158 = smul.u32 4, %s22
          %p2159 = scmp.lt.s32.totalorder %s2158, 7
          %s2160 = scalar_select %p2159, %s2158, 7
          %s2161 = smul.addr %s2160, 2
          %s2162 = scalar_lea.vmem %s2, %s2161
        $region48: #{_zca_forward_impl.1} parent=43 // pred_fallthru
          _
      $region44: #{_zca_forward_impl.1} parent=5 // pred_fallthru
        _
    $region6: #{_zca_forward_impl.1} parent=1 // loop_footer
      %s15 = sadd.s32 1, %s11
    $region7: #{_zca_forward_impl.1} parent=1 // loop_footer_branch
      %10 = sbr.rel target = $region3
    $region8: #{_zca_forward_impl.1} parent=1 // loop_exit
      _
    %2163 = vsyncpa [#allocation3], 1
    %s2164 = scalar_lea.sflag [#allocation3], 1
    %2165 = vsyncpa %s2164, 1

</llo_original>
